<compile_context>
chip_gen: v7x
topology: tpu7x:2x2x1
jax: 0.10.0
libtpu: 0.0.40
codegen_flags: <defaults>
</compile_context>

<pallas_src>
import jax
import jax.numpy as jnp
import numpy as np
from jax.experimental import pallas as pl
from jax.experimental.pallas import tpu as pltpu

N_DIMS = 768        # DistilBERT hidden size (fixed by the module)
VOCAB = 100         # synthetic vocabulary for the embedding stand-in
LANE = 128          # TPU lane width: narrow feature dims are zero-padded to this
N_CLASSES = 2

W34_SPLIT = N_DIMS // 4          # 192: rows [0, 192) of the tail slab are w3 (padded to 128 cols)
W5_OFF = W34_SPLIT + LANE        # 320: rows [192, 320) are w4; rows [320, 320+S*64) are w5 slabs
W5_IN = 64                       # classifier contraction width (real 48, padded to 64)


def nn_head_kernel(hs_ref,                       # (B*S, 768)          f32
                   w1_ref,                       # (768, 384)          bf16
                   w2_ref,                       # (384, 192)          bf16
                   wtail_ref,                    # (320 + S*64, 128)   bf16: w3p | w4p | w5 slabs
                   b_ref,                        # (5, 384)            f32 packed biases
                   out_ref):                     # (B, 128)            f32, only first 2 lanes real
    """Fused hot path of NN.forward:
       hidden_layers (4x Linear+ReLU) -> flatten -> output_layer -> log_softmax.
       Everything fits in VMEM at these shapes, so a single grid-less call."""
    R = hs_ref.shape[0]                              # R = B*S rows
    S = (wtail_ref.shape[0] - W5_OFF) // W5_IN       # static at trace time
    B = R // S

    def dense_relu(x_bf16, w_bf16, b_f32):
        h = jnp.dot(x_bf16, w_bf16, preferred_element_type=jnp.float32)
        return jnp.maximum(h + b_f32, 0.0).astype(jnp.bfloat16)   # bias/ReLU in f32, one cast out

    x = hs_ref[...].astype(jnp.bfloat16)                                   # cast once, in-kernel
    h = dense_relu(x, w1_ref[...], b_ref[0:1, :])                          # (R, 384)
    h = dense_relu(h, w2_ref[...], b_ref[1:2, :N_DIMS // 4])               # (R, 192)
    h = dense_relu(h, wtail_ref[0:W34_SPLIT, :], b_ref[2:3, :LANE])        # (R, 128) cols 96: exact 0
    h = dense_relu(h, wtail_ref[W34_SPLIT:W5_OFF, :], b_ref[3:4, :LANE])   # (R, 128) cols 48: exact 0

    # nn.Flatten + output Linear without the lane-crossing (B, S*48) reshape:
    # split rows back into (B, S, 128) (free: leading-dim split) and contract each
    # sequence position against its own (64, 128) weight slab.  Lanes 48..63 of h and
    # rows 48..63 of each slab are exact zeros, so only the 48 real features contribute.
    h = h.reshape(B, S, LANE)                        # already bf16 (single cast above)
    parts = [
        jnp.dot(h[:, s, :W5_IN],
                wtail_ref[W5_OFF + s * W5_IN:W5_OFF + (s + 1) * W5_IN, :],
                preferred_element_type=jnp.float32)
        for s in range(S)                            # S = 8, static unroll, independent MXU pushes
    ]
    while len(parts) > 1:                            # pairwise tree-sum: no serial acc chain
        nxt = [parts[i] + parts[i + 1] for i in range(0, len(parts) - 1, 2)]
        if len(parts) % 2:
            nxt.append(parts[-1])
        parts = nxt
    scores = parts[0] + b_ref[4:5, :LANE]            # (B, 128), padded lanes are exact 0

    # LogSoftmax(dim=1) over the 2 real classes; padded lanes are masked out of the
    # reduction and dropped outside the kernel (keeps the output store lane-dense).
    col = jax.lax.broadcasted_iota(jnp.int32, (B, LANE), 1)
    valid = col < N_CLASSES
    s_m = jnp.where(valid, scores, jnp.float32(-1e30))
    m = jnp.max(s_m, axis=1, keepdims=True)
    e = jnp.where(valid, jnp.exp(s_m - m), 0.0)
    lse = m + jnp.log(jnp.sum(e, axis=1, keepdims=True))
    out_ref[...] = s_m - lse


def prepare_params(params, n_features):
    """Cast weights to bf16, zero-pad narrow dims to lane-dense widths, and pack the
       small tensors into single buffers (fewer kernel args = fewer DMA descriptors).
       All padded entries are exact zeros, so they contribute nothing."""
    w1, b1, w2, b2, w3, b3, w4, b4, w5, b5 = params
    S = n_features
    d3, d4 = N_DIMS // 8, N_DIMS // 16                       # 96, 48
    # tail weights, each padded to 128 output lanes
    w3p = jnp.zeros((N_DIMS // 4, LANE), jnp.float32).at[:, :d3].set(w3)        # (192, 128)
    w4p = jnp.zeros((LANE, LANE), jnp.float32).at[:d3, :d4].set(w4)             # (128, 128)
    w5r = w5.reshape(S, d4, N_CLASSES)                        # undo nn.Flatten on the weight side
    w5p = jnp.zeros((S, W5_IN, LANE), jnp.float32).at[:, :d4, :N_CLASSES].set(w5r)  # (S, 64, 128)
    wtail = jnp.concatenate([w3p, w4p, w5p.reshape(S * W5_IN, LANE)], axis=0)   # (320 + S*64, 128)
    # five biases packed into one lane-dense f32 buffer, one (zero-padded) row each
    bpack = jnp.zeros((5, N_DIMS // 2), jnp.float32)
    bpack = bpack.at[0, :].set(b1[0])
    bpack = bpack.at[1, :N_DIMS // 4].set(b2[0])
    bpack = bpack.at[2, :d3].set(b3[0])
    bpack = bpack.at[3, :d4].set(b4[0])
    bpack = bpack.at[4, :N_CLASSES].set(b5[0])
    bf = lambda a: a.astype(jnp.bfloat16)
    # Biases stay f32: they are added to the f32 MXU accumulator on the VPU.
    return (bf(w1), bf(w2), bf(wtail), bpack)


def nn_forward_pallas(hidden_states, prepared):
    """hidden_states: (B, S, N_DIMS) float32 — the `last_hidden_state` tensor."""
    B, S, D = hidden_states.shape
    assert D == N_DIMS
    w1, w2, wtail, bpack = prepared
    assert wtail.shape[0] == W5_OFF + S * W5_IN
    # Row-major (B*S, D) reshape is a bitcast in HBM; stays f32 — the bf16 cast happens
    # inside the kernel, avoiding a separate XLA convert op and an HBM round trip.
    hs2 = hidden_states.reshape(B * S, D)

    flops = (2 * B * S * (D * (D // 2) + (D // 2) * (D // 4) + (D // 4) * LANE + LANE * LANE)
             + 2 * B * S * W5_IN * LANE)
    bytes_accessed = (hs2.size * 4
                      + sum(int(p.size) * p.dtype.itemsize for p in prepared)
                      + B * LANE * 4)
    cost = pl.CostEstimate(flops=int(flops), transcendentals=B * (LANE + 1),
                           bytes_accessed=int(bytes_accessed))

    vmem = pl.BlockSpec(memory_space=pltpu.MemorySpace.VMEM)
    # Grid-less single block: ~0.9 MiB of weights + 16 activation rows fit easily in VMEM.
    # TODO(synk): if B*S ever scales up, add a row grid (128-row tiles on v5e, 256 on
    # v6e/v7x) with dimension_semantics=("parallel",) — the parallel row axis also shards
    # across v7x's 2 TensorCores — keep weights resident via index_map lambda i: (0, 0),
    # and mind the scoped-VMEM default (v7x: 32 MiB scoped of 64 MiB physical).
    out_pad = pl.pallas_call(
        nn_head_kernel,
        out_shape=jax.ShapeDtypeStruct((B, LANE), jnp.float32),
        in_specs=[vmem] * 5,
        out_specs=vmem,
        cost_estimate=cost,
    )(hs2, w1, w2, wtail, bpack)
    return out_pad[:, :N_CLASSES]                 # drop the padded lanes


def nn_forward_ref_f32(hidden_states, params):
    """Pure-f32 reference of the module's math (semantic check)."""
    w1, b1, w2, b2, w3, b3, w4, b4, w5, b5 = params
    B, S, D = hidden_states.shape
    h = hidden_states.reshape(B * S, D)
    for w, b in ((w1, b1), (w2, b2), (w3, b3), (w4, b4)):
        h = jnp.maximum(h @ w + b, 0.0)
    flat = h.reshape(B, S * (N_DIMS // 16))
    scores = flat @ w5 + b5
    return jax.nn.log_softmax(scores, axis=1)


def nn_forward_ref_mixed(hidden_states, params):
    """Mirrors the kernel's bf16-operand / f32-accumulate dtype path (unpadded)."""
    w1, b1, w2, b2, w3, b3, w4, b4, w5, b5 = params
    B, S, D = hidden_states.shape
    bf = jnp.bfloat16
    h = hidden_states.astype(bf).reshape(B * S, D)
    for w, b in ((w1, b1), (w2, b2), (w3, b3), (w4, b4)):
        h = jnp.maximum(jnp.dot(h, w.astype(bf), preferred_element_type=jnp.float32) + b, 0.0)
        h = h.astype(bf)
    flat = h.reshape(B, S * (N_DIMS // 16))
    scores = jnp.dot(flat, w5.astype(bf), preferred_element_type=jnp.float32) + b5
    return jax.nn.log_softmax(scores, axis=1)


def init_params(key, n_features):
    """Deterministic synthetic weights (module __init__ defines the shapes).
       Weights stored [in, out]; biases stored [1, out] (2-D for TPU layout)."""
    dims = [N_DIMS, N_DIMS // 2, N_DIMS // 4, N_DIMS // 8, N_DIMS // 16]
    params = []
    keys = jax.random.split(key, 10)
    ki = 0
    for d_in, d_out in zip(dims[:-1], dims[1:]):
        w = jax.random.normal(keys[ki], (d_in, d_out), jnp.float32) * (1.0 / np.sqrt(d_in))
        b = jax.random.normal(keys[ki + 1], (1, d_out), jnp.float32) * 0.01
        params += [w, b]
        ki += 2
    d_in = N_DIMS * n_features // 16
    w5 = jax.random.normal(keys[8], (d_in, N_CLASSES), jnp.float32) * (1.0 / np.sqrt(d_in))
    b5 = jax.random.normal(keys[9], (1, N_CLASSES), jnp.float32) * 0.01
    params += [w5, b5]
    return params


if __name__ == "__main__":
    B, S = 2, 8          # n_features == S (Flatten produces N_DIMS * S // 16 features)
    key = jax.random.PRNGKey(0)
    k_tok, k_emb, k_par = jax.random.split(key, 3)

    # Token-id input, as the PyTorch module feeds ids into DistilBERT.
    x_ids = jax.random.randint(k_tok, (B, S), 0, VOCAB, dtype=jnp.int32)

    # TODO(synk): the pretrained DistilBertModel encoder (checkpoint load) has no
    # in-script equivalent; it is replaced by a deterministic embedding lookup
    # producing a `last_hidden_state`-shaped tensor (B, S, 768).
    emb_table = jax.random.normal(k_emb, (VOCAB, N_DIMS), jnp.float32) * 0.02
    last_hidden_state = emb_table[x_ids]                       # (B, S, 768)

    params = init_params(k_par, n_features=S)
    prepared = prepare_params(params, n_features=S)

    out = jax.block_until_ready(nn_forward_pallas(last_hidden_state, prepared))

    ref_mixed = jax.block_until_ready(nn_forward_ref_mixed(last_hidden_state, params))
    ref_f32 = jax.block_until_ready(nn_forward_ref_f32(last_hidden_state, params))

    assert out.shape == (B, N_CLASSES)
    # tight check against a reference with the same bf16-operand / f32-accumulate path
    assert np.allclose(np.asarray(out), np.asarray(ref_mixed), atol=1e-3, rtol=1e-3)
    # looser check against the pure-f32 semantics of the original module
    assert np.allclose(np.asarray(out), np.asarray(ref_f32), atol=2e-2, rtol=2e-2)
    # log-probs over 2 classes must sum to 1 after exp
    assert np.allclose(np.exp(np.asarray(out)).sum(axis=1), 1.0, atol=1e-5)

    print("KERNEL_OK")
</pallas_src>

<mosaic_0001>
module attributes {stable_mosaic.version = 11 : i64} {
  func.func @nn_head_kernel(%arg0: memref<16x768xf32, #tpu.memory_space<vmem>>, %arg1: memref<768x384xbf16, #tpu.memory_space<vmem>>, %arg2: memref<384x192xbf16, #tpu.memory_space<vmem>>, %arg3: memref<832x128xbf16, #tpu.memory_space<vmem>>, %arg4: memref<5x384xf32, #tpu.memory_space<vmem>>, %arg5: memref<2x128xf32, #tpu.memory_space<vmem>>) attributes {dimension_semantics = [], scalar_prefetch = 0 : i64, scratch_operands = 0 : i64, tpu.core_type = #tpu.core_type<tc>} {
    %c0 = arith.constant 0 : index
    %c0_0 = arith.constant 0 : index
    %0 = vector.load %arg0[%c0, %c0_0] : memref<16x768xf32, #tpu.memory_space<vmem>>, vector<16x768xf32>
    %1 = arith.truncf %0 : vector<16x768xf32> to vector<16x768xbf16>
    %c0_1 = arith.constant 0 : index
    %c0_2 = arith.constant 0 : index
    %2 = vector.load %arg1[%c0_1, %c0_2] : memref<768x384xbf16, #tpu.memory_space<vmem>>, vector<768x384xbf16>
    %c0_3 = arith.constant 0 : index
    %c0_4 = arith.constant 0 : index
    %3 = vector.load %arg4[%c0_3, %c0_4] : memref<5x384xf32, #tpu.memory_space<vmem>>, vector<1x384xf32>
    %cst = arith.constant dense<0.000000e+00> : vector<16x384xf32>
    %4 = tpu.matmul %1, %2, %cst {dimension_numbers = #tpu.dot_dimension_numbers<[1], [0], [0], [1], [0, 0, 1, 1], [], []>} : vector<16x768xbf16>, vector<768x384xbf16>, vector<16x384xf32> -> vector<16x384xf32>
    %5 = vector.broadcast %3 : vector<1x384xf32> to vector<16x384xf32>
    %6 = arith.addf %4, %5 : vector<16x384xf32>
    %cst_5 = arith.constant 0.000000e+00 : f32
    %7 = vector.broadcast %cst_5 : f32 to vector<16x384xf32>
    %8 = arith.maximumf %6, %7 : vector<16x384xf32>
    %9 = arith.truncf %8 : vector<16x384xf32> to vector<16x384xbf16>
    %c0_6 = arith.constant 0 : index
    %c0_7 = arith.constant 0 : index
    %10 = vector.load %arg2[%c0_6, %c0_7] : memref<384x192xbf16, #tpu.memory_space<vmem>>, vector<384x192xbf16>
    %c1 = arith.constant 1 : index
    %c0_8 = arith.constant 0 : index
    %11 = vector.load %arg4[%c1, %c0_8] : memref<5x384xf32, #tpu.memory_space<vmem>>, vector<1x192xf32>
    %cst_9 = arith.constant dense<0.000000e+00> : vector<16x192xf32>
    %12 = tpu.matmul %9, %10, %cst_9 {dimension_numbers = #tpu.dot_dimension_numbers<[1], [0], [0], [1], [0, 0, 1, 1], [], []>} : vector<16x384xbf16>, vector<384x192xbf16>, vector<16x192xf32> -> vector<16x192xf32>
    %13 = vector.broadcast %11 : vector<1x192xf32> to vector<16x192xf32>
    %14 = arith.addf %12, %13 : vector<16x192xf32>
    %cst_10 = arith.constant 0.000000e+00 : f32
    %15 = vector.broadcast %cst_10 : f32 to vector<16x192xf32>
    %16 = arith.maximumf %14, %15 : vector<16x192xf32>
    %17 = arith.truncf %16 : vector<16x192xf32> to vector<16x192xbf16>
    %c0_11 = arith.constant 0 : index
    %c0_12 = arith.constant 0 : index
    %18 = vector.load %arg3[%c0_11, %c0_12] : memref<832x128xbf16, #tpu.memory_space<vmem>>, vector<192x128xbf16>
    %c2 = arith.constant 2 : index
    %c0_13 = arith.constant 0 : index
    %19 = vector.load %arg4[%c2, %c0_13] : memref<5x384xf32, #tpu.memory_space<vmem>>, vector<1x128xf32>
    %cst_14 = arith.constant dense<0.000000e+00> : vector<16x128xf32>
    %20 = tpu.matmul %17, %18, %cst_14 {dimension_numbers = #tpu.dot_dimension_numbers<[1], [0], [0], [1], [0, 0, 1, 1], [], []>} : vector<16x192xbf16>, vector<192x128xbf16>, vector<16x128xf32> -> vector<16x128xf32>
    %21 = vector.broadcast %19 : vector<1x128xf32> to vector<16x128xf32>
    %22 = arith.addf %20, %21 : vector<16x128xf32>
    %cst_15 = arith.constant 0.000000e+00 : f32
    %23 = vector.broadcast %cst_15 : f32 to vector<16x128xf32>
    %24 = arith.maximumf %22, %23 : vector<16x128xf32>
    %25 = arith.truncf %24 : vector<16x128xf32> to vector<16x128xbf16>
    %c192 = arith.constant 192 : index
    %c0_16 = arith.constant 0 : index
    %26 = vector.load %arg3[%c192, %c0_16] : memref<832x128xbf16, #tpu.memory_space<vmem>>, vector<128x128xbf16>
    %c3 = arith.constant 3 : index
    %c0_17 = arith.constant 0 : index
    %27 = vector.load %arg4[%c3, %c0_17] : memref<5x384xf32, #tpu.memory_space<vmem>>, vector<1x128xf32>
    %cst_18 = arith.constant dense<0.000000e+00> : vector<16x128xf32>
    %28 = tpu.matmul %25, %26, %cst_18 {dimension_numbers = #tpu.dot_dimension_numbers<[1], [0], [0], [1], [0, 0, 1, 1], [], []>} : vector<16x128xbf16>, vector<128x128xbf16>, vector<16x128xf32> -> vector<16x128xf32>
    %29 = vector.broadcast %27 : vector<1x128xf32> to vector<16x128xf32>
    %30 = arith.addf %28, %29 : vector<16x128xf32>
    %cst_19 = arith.constant 0.000000e+00 : f32
    %31 = vector.broadcast %cst_19 : f32 to vector<16x128xf32>
    %32 = arith.maximumf %30, %31 : vector<16x128xf32>
    %33 = arith.truncf %32 : vector<16x128xf32> to vector<16x128xbf16>
    %34 = vector.shape_cast %33 : vector<16x128xbf16> to vector<2x8x128xbf16>
    %35 = vector.extract_strided_slice %34 {offsets = [0, 0, 0], sizes = [2, 1, 64], strides = [1, 1, 1]} : vector<2x8x128xbf16> to vector<2x1x64xbf16>
    %36 = vector.shape_cast %35 : vector<2x1x64xbf16> to vector<2x64xbf16>
    %c320 = arith.constant 320 : index
    %c0_20 = arith.constant 0 : index
    %37 = vector.load %arg3[%c320, %c0_20] : memref<832x128xbf16, #tpu.memory_space<vmem>>, vector<64x128xbf16>
    %cst_21 = arith.constant dense<0.000000e+00> : vector<2x128xf32>
    %38 = tpu.matmul %36, %37, %cst_21 {dimension_numbers = #tpu.dot_dimension_numbers<[1], [0], [0], [1], [0, 0, 1, 1], [], []>} : vector<2x64xbf16>, vector<64x128xbf16>, vector<2x128xf32> -> vector<2x128xf32>
    %39 = vector.extract_strided_slice %34 {offsets = [0, 1, 0], sizes = [2, 1, 64], strides = [1, 1, 1]} : vector<2x8x128xbf16> to vector<2x1x64xbf16>
    %40 = vector.shape_cast %39 : vector<2x1x64xbf16> to vector<2x64xbf16>
    %c384 = arith.constant 384 : index
    %c0_22 = arith.constant 0 : index
    %41 = vector.load %arg3[%c384, %c0_22] : memref<832x128xbf16, #tpu.memory_space<vmem>>, vector<64x128xbf16>
    %cst_23 = arith.constant dense<0.000000e+00> : vector<2x128xf32>
    %42 = tpu.matmul %40, %41, %cst_23 {dimension_numbers = #tpu.dot_dimension_numbers<[1], [0], [0], [1], [0, 0, 1, 1], [], []>} : vector<2x64xbf16>, vector<64x128xbf16>, vector<2x128xf32> -> vector<2x128xf32>
    %43 = vector.extract_strided_slice %34 {offsets = [0, 2, 0], sizes = [2, 1, 64], strides = [1, 1, 1]} : vector<2x8x128xbf16> to vector<2x1x64xbf16>
    %44 = vector.shape_cast %43 : vector<2x1x64xbf16> to vector<2x64xbf16>
    %c448 = arith.constant 448 : index
    %c0_24 = arith.constant 0 : index
    %45 = vector.load %arg3[%c448, %c0_24] : memref<832x128xbf16, #tpu.memory_space<vmem>>, vector<64x128xbf16>
    %cst_25 = arith.constant dense<0.000000e+00> : vector<2x128xf32>
    %46 = tpu.matmul %44, %45, %cst_25 {dimension_numbers = #tpu.dot_dimension_numbers<[1], [0], [0], [1], [0, 0, 1, 1], [], []>} : vector<2x64xbf16>, vector<64x128xbf16>, vector<2x128xf32> -> vector<2x128xf32>
    %47 = vector.extract_strided_slice %34 {offsets = [0, 3, 0], sizes = [2, 1, 64], strides = [1, 1, 1]} : vector<2x8x128xbf16> to vector<2x1x64xbf16>
    %48 = vector.shape_cast %47 : vector<2x1x64xbf16> to vector<2x64xbf16>
    %c512 = arith.constant 512 : index
    %c0_26 = arith.constant 0 : index
    %49 = vector.load %arg3[%c512, %c0_26] : memref<832x128xbf16, #tpu.memory_space<vmem>>, vector<64x128xbf16>
    %cst_27 = arith.constant dense<0.000000e+00> : vector<2x128xf32>
    %50 = tpu.matmul %48, %49, %cst_27 {dimension_numbers = #tpu.dot_dimension_numbers<[1], [0], [0], [1], [0, 0, 1, 1], [], []>} : vector<2x64xbf16>, vector<64x128xbf16>, vector<2x128xf32> -> vector<2x128xf32>
    %51 = vector.extract_strided_slice %34 {offsets = [0, 4, 0], sizes = [2, 1, 64], strides = [1, 1, 1]} : vector<2x8x128xbf16> to vector<2x1x64xbf16>
    %52 = vector.shape_cast %51 : vector<2x1x64xbf16> to vector<2x64xbf16>
    %c576 = arith.constant 576 : index
    %c0_28 = arith.constant 0 : index
    %53 = vector.load %arg3[%c576, %c0_28] : memref<832x128xbf16, #tpu.memory_space<vmem>>, vector<64x128xbf16>
    %cst_29 = arith.constant dense<0.000000e+00> : vector<2x128xf32>
    %54 = tpu.matmul %52, %53, %cst_29 {dimension_numbers = #tpu.dot_dimension_numbers<[1], [0], [0], [1], [0, 0, 1, 1], [], []>} : vector<2x64xbf16>, vector<64x128xbf16>, vector<2x128xf32> -> vector<2x128xf32>
    %55 = vector.extract_strided_slice %34 {offsets = [0, 5, 0], sizes = [2, 1, 64], strides = [1, 1, 1]} : vector<2x8x128xbf16> to vector<2x1x64xbf16>
    %56 = vector.shape_cast %55 : vector<2x1x64xbf16> to vector<2x64xbf16>
    %c640 = arith.constant 640 : index
    %c0_30 = arith.constant 0 : index
    %57 = vector.load %arg3[%c640, %c0_30] : memref<832x128xbf16, #tpu.memory_space<vmem>>, vector<64x128xbf16>
    %cst_31 = arith.constant dense<0.000000e+00> : vector<2x128xf32>
    %58 = tpu.matmul %56, %57, %cst_31 {dimension_numbers = #tpu.dot_dimension_numbers<[1], [0], [0], [1], [0, 0, 1, 1], [], []>} : vector<2x64xbf16>, vector<64x128xbf16>, vector<2x128xf32> -> vector<2x128xf32>
    %59 = vector.extract_strided_slice %34 {offsets = [0, 6, 0], sizes = [2, 1, 64], strides = [1, 1, 1]} : vector<2x8x128xbf16> to vector<2x1x64xbf16>
    %60 = vector.shape_cast %59 : vector<2x1x64xbf16> to vector<2x64xbf16>
    %c704 = arith.constant 704 : index
    %c0_32 = arith.constant 0 : index
    %61 = vector.load %arg3[%c704, %c0_32] : memref<832x128xbf16, #tpu.memory_space<vmem>>, vector<64x128xbf16>
    %cst_33 = arith.constant dense<0.000000e+00> : vector<2x128xf32>
    %62 = tpu.matmul %60, %61, %cst_33 {dimension_numbers = #tpu.dot_dimension_numbers<[1], [0], [0], [1], [0, 0, 1, 1], [], []>} : vector<2x64xbf16>, vector<64x128xbf16>, vector<2x128xf32> -> vector<2x128xf32>
    %63 = vector.extract_strided_slice %34 {offsets = [0, 7, 0], sizes = [2, 1, 64], strides = [1, 1, 1]} : vector<2x8x128xbf16> to vector<2x1x64xbf16>
    %64 = vector.shape_cast %63 : vector<2x1x64xbf16> to vector<2x64xbf16>
    %c768 = arith.constant 768 : index
    %c0_34 = arith.constant 0 : index
    %65 = vector.load %arg3[%c768, %c0_34] : memref<832x128xbf16, #tpu.memory_space<vmem>>, vector<64x128xbf16>
    %cst_35 = arith.constant dense<0.000000e+00> : vector<2x128xf32>
    %66 = tpu.matmul %64, %65, %cst_35 {dimension_numbers = #tpu.dot_dimension_numbers<[1], [0], [0], [1], [0, 0, 1, 1], [], []>} : vector<2x64xbf16>, vector<64x128xbf16>, vector<2x128xf32> -> vector<2x128xf32>
    %67 = arith.addf %38, %42 : vector<2x128xf32>
    %68 = arith.addf %46, %50 : vector<2x128xf32>
    %69 = arith.addf %54, %58 : vector<2x128xf32>
    %70 = arith.addf %62, %66 : vector<2x128xf32>
    %71 = arith.addf %67, %68 : vector<2x128xf32>
    %72 = arith.addf %69, %70 : vector<2x128xf32>
    %73 = arith.addf %71, %72 : vector<2x128xf32>
    %c4 = arith.constant 4 : index
    %c0_36 = arith.constant 0 : index
    %74 = vector.load %arg4[%c4, %c0_36] : memref<5x384xf32, #tpu.memory_space<vmem>>, vector<1x128xf32>
    %75 = vector.broadcast %74 : vector<1x128xf32> to vector<2x128xf32>
    %76 = arith.addf %73, %75 : vector<2x128xf32>
    %77 = tpu.iota {dimensions = array<i32: 1>} : vector<2x128xi32>
    %c2_i32 = arith.constant 2 : i32
    %78 = vector.broadcast %c2_i32 : i32 to vector<2x128xi32>
    %79 = arith.cmpi slt, %77, %78 : vector<2x128xi32>
    %cst_37 = arith.constant -1.000000e+30 : f32
    %80 = vector.broadcast %cst_37 : f32 to vector<2x128xf32>
    %81 = arith.select %79, %76, %80 : vector<2x128xi1>, vector<2x128xf32>
    %cst_38 = arith.constant dense<0xFF800000> : vector<2xf32>
    %82 = vector.multi_reduction <maximumf>, %81, %cst_38 [1] : vector<2x128xf32> to vector<2xf32>
    %83 = vector.shape_cast %82 : vector<2xf32> to vector<2x1xf32>
    %84 = vector.broadcast %83 : vector<2x1xf32> to vector<2x128xf32>
    %85 = arith.subf %81, %84 : vector<2x128xf32>
    %86 = math.exp %85 : vector<2x128xf32>
    %cst_39 = arith.constant 0.000000e+00 : f32
    %87 = vector.broadcast %cst_39 : f32 to vector<2x128xf32>
    %88 = arith.select %79, %86, %87 : vector<2x128xi1>, vector<2x128xf32>
    %cst_40 = arith.constant dense<0.000000e+00> : vector<2xf32>
    %89 = vector.multi_reduction <add>, %88, %cst_40 [1] : vector<2x128xf32> to vector<2xf32>
    %90 = vector.shape_cast %89 : vector<2xf32> to vector<2x1xf32>
    %91 = math.log %90 : vector<2x1xf32>
    %92 = arith.addf %83, %91 : vector<2x1xf32>
    %93 = vector.broadcast %92 : vector<2x1xf32> to vector<2x128xf32>
    %94 = arith.subf %81, %93 : vector<2x128xf32>
    %c0_41 = arith.constant 0 : index
    %c0_42 = arith.constant 0 : index
    %95 = vector.load %arg5[%c0_41, %c0_42] : memref<2x128xf32, #tpu.memory_space<vmem>>, vector<2x128xf32>
    tpu.vector_store %arg5[%c0_41, %c0_42], %94 {strides = array<i32>} : memref<2x128xf32, #tpu.memory_space<vmem>>, vector<2x128xf32>,
    return
  }
}

</mosaic_0001>

<llo_original>
// kernel: tpu_custom_call.1
$region0: #{tpu_custom_call.1}
  #allocation0 [shape = 'u32[]', space=smem, size = 0x4, offset = 0x4, fixed_abs, tag = 'smem constant byte address 0x4 - core index']
  #allocation1 [shape = 'u32[144,128]{1,0:T(1,128)}', space=vmem, size = 0x12000, scoped, tag = 'internal scratch']
  %s0 = inlined_call_operand.vmem [shape: f32[16,768], index: 0, kind: input, shape index: {}]
  %s1 = inlined_call_operand.hbm [shape: bf16[768,384], index: 1, kind: input, shape index: {}]
  %s2 = inlined_call_operand.vmem [shape: bf16[384,192], index: 2, kind: input, shape index: {}]
  %s3 = inlined_call_operand.vmem [shape: bf16[832,128], index: 3, kind: input, shape index: {}]
  %s4 = inlined_call_operand.vmem [shape: f32[5,384], index: 4, kind: input, shape index: {}]
  %s5 = inlined_call_operand.hbm [shape: f32[2,128], index: 5, kind: output, shape index: {}]
  %s6 = sld [smem:[#allocation0]]
  $region34: #{tpu_custom_call.1} parent=0
    _
  %s8 = ssub.s32 1, %s6
  %s9 = scalar_select 0, %s8, %s6
  $region1: #{tpu_custom_call.1} parent=0
    #allocation2 [shape = 'u8[589824]{0}', space=vmem, size = 0x90000, scoped, tag = 'input window, operand 1, single buffered']
    #allocation3 [shape = 's32[1]{0}', space=sflag, size = 0x4, scoped, tag = 'scoped memory for tpu_custom_call.1']
    #allocation4 [shape = 's32[1]{0}', space=sflag, size = 0x4, scoped, tag = 'scoped memory for tpu_custom_call.1']
    #allocation5 [shape = 'u8[1024]{0}', space=vmem, size = 0x400, scoped, tag = 'output window, operand 0, single buffered']
    %10 = vsyncpa [#allocation3], 0
    %11 = vsyncpa [#allocation4], 0
    // Predicated region
    $region2: #{tpu_custom_call.1} parent=1 // pred_check
      _
    $region3: #{tpu_custom_call.1} parent=1 // pred_check_branch
      %13 = sbr.rel (0) target = $region5
    $region4: #{tpu_custom_call.1} parent=1 // pred_region
      _
    $region5: #{tpu_custom_call.1} parent=1 // pred_fallthru
      _
    // Predicated region
    $region6: #{tpu_custom_call.1} parent=1 // pred_check
      _
    $region7: #{tpu_custom_call.1} parent=1 // pred_check_branch
      %15 = sbr.rel (0) target = $region9
    $region8: #{tpu_custom_call.1} parent=1 // pred_region
      %s17 = ssub.s32 18432, 18432
      %18 = vsyncadd [#allocation3], %s17
      %s19 = sshll.u32 [#allocation2], 4
      %s20 = int_to_ptr.vmem [resolvable:$true] %s19
      %25 = dma.hbm_to_vmem [thread:$0]  %s1, 18432, %s20, [#allocation3], 192, 192, 12
    $region9: #{tpu_custom_call.1} parent=1 // pred_fallthru
      _
    // Predicated region
    $region10: #{tpu_custom_call.1} parent=1 // pred_check
      _
    $region11: #{tpu_custom_call.1} parent=1 // pred_check_branch
      %27 = sbr.rel (0) target = $region13
    $region12: #{tpu_custom_call.1} parent=1 // pred_region
      _
    $region13: #{tpu_custom_call.1} parent=1 // pred_fallthru
      _
    // Predicated region
    $region14: #{tpu_custom_call.1} parent=1 // pred_check
      _
    $region15: #{tpu_custom_call.1} parent=1 // pred_check_branch
      %29 = sbr.rel (0) target = $region17
    $region16: #{tpu_custom_call.1} parent=1 // pred_region
      _
    $region17: #{tpu_custom_call.1} parent=1 // pred_fallthru
      _
    // Predicated region
    $region18: #{tpu_custom_call.1} parent=1 // pred_check
      _
    $region19: #{tpu_custom_call.1} parent=1 // pred_check_branch
      %31 = sbr.rel (0) target = $region21
    $region20: #{tpu_custom_call.1} parent=1 // pred_region
      _
    $region21: #{tpu_custom_call.1} parent=1 // pred_fallthru
      _
    // Predicated region
    $region22: #{tpu_custom_call.1} parent=1 // pred_check
      _
    $region23: #{tpu_custom_call.1} parent=1 // pred_check_branch
      %33 = sbr.rel (0) target = $region25
    $region24: #{tpu_custom_call.1} parent=1 // pred_region
      %34 = dma.done [#allocation3], 18432
    $region25: #{tpu_custom_call.1} parent=1 // pred_fallthru
      _
    %v36 = vld [vmem:[%s0] sm:$0xff]
    %v37 = vld [vmem:[%s0 + $0x8] sm:$0xff]
    %v38 = vld [vmem:[%s0 + $0x10] sm:$0xff]
    %v39 = vld [vmem:[%s0 + $0x18] sm:$0xff]
    %v40 = vld [vmem:[%s0 + $0x20] sm:$0xff]
    %v41 = vld [vmem:[%s0 + $0x28] sm:$0xff]
    %v42 = vld [vmem:[%s0 + $0x30] sm:$0xff]
    %v43 = vld [vmem:[%s0 + $0x38] sm:$0xff]
    %v44 = vld [vmem:[%s0 + $0x40] sm:$0xff]
    %v45 = vld [vmem:[%s0 + $0x48] sm:$0xff]
    %v46 = vld [vmem:[%s0 + $0x50] sm:$0xff]
    %v47 = vld [vmem:[%s0 + $0x58] sm:$0xff]
    %v48 = vpack.c.bf16 %v42, %v36
    %v49 = vpack.c.bf16 %v43, %v37
    %v50 = vpack.c.bf16 %v44, %v38
    %v51 = vpack.c.bf16 %v45, %v39
    %v52 = vpack.c.bf16 %v46, %v40
    %v53 = vpack.c.bf16 %v47, %v41
    %v54 = vld [vmem:[#allocation2] sm:$0xff]
    %v55 = vld [vmem:[#allocation2 + $0x8] sm:$0xf]
    %v56 = vld [vmem:[#allocation2 + $0xc] sm:$0xff]
    %v57 = vld [vmem:[#allocation2 + $0x14] sm:$0xf]
    %v58 = vld [vmem:[#allocation2 + $0x18] sm:$0xff]
    %v59 = vld [vmem:[#allocation2 + $0x20] sm:$0xf]
    %v60 = vld [vmem:[#allocation2 + $0x24] sm:$0xff]
    %v61 = vld [vmem:[#allocation2 + $0x2c] sm:$0xf]
    %v62 = vld [vmem:[#allocation2 + $0x30] sm:$0xff]
    %v63 = vld [vmem:[#allocation2 + $0x38] sm:$0xf]
    %v64 = vld [vmem:[#allocation2 + $0x3c] sm:$0xff]
    %v65 = vld [vmem:[#allocation2 + $0x44] sm:$0xf]
    %v66 = vld [vmem:[#allocation2 + $0x48] sm:$0xff]
    %v67 = vld [vmem:[#allocation2 + $0x50] sm:$0xf]
    %v68 = vld [vmem:[#allocation2 + $0x54] sm:$0xff]
    %v69 = vld [vmem:[#allocation2 + $0x5c] sm:$0xf]
    %v70 = vld [vmem:[#allocation2 + $0x60] sm:$0xff]
    %v71 = vld [vmem:[#allocation2 + $0x68] sm:$0xf]
    %v72 = vld [vmem:[#allocation2 + $0x6c] sm:$0xff]
    %v73 = vld [vmem:[#allocation2 + $0x74] sm:$0xf]
    %v74 = vld [vmem:[#allocation2 + $0x78] sm:$0xff]
    %v75 = vld [vmem:[#allocation2 + $0x80] sm:$0xf]
    %v76 = vld [vmem:[#allocation2 + $0x84] sm:$0xff]
    %v77 = vld [vmem:[#allocation2 + $0x8c] sm:$0xf]
    %v78 = vld [vmem:[#allocation2 + $0x90] sm:$0xff]
    %v79 = vld [vmem:[#allocation2 + $0x98] sm:$0xf]
    %v80 = vld [vmem:[#allocation2 + $0x9c] sm:$0xff]
    %v81 = vld [vmem:[#allocation2 + $0xa4] sm:$0xf]
    %v82 = vld [vmem:[#allocation2 + $0xa8] sm:$0xff]
    %v83 = vld [vmem:[#allocation2 + $0xb0] sm:$0xf]
    %v84 = vld [vmem:[#allocation2 + $0xb4] sm:$0xff]
    %v85 = vld [vmem:[#allocation2 + $0xbc] sm:$0xf]
    %v86 = vld [vmem:[#allocation2 + $0xc0] sm:$0xff]
    %v87 = vld [vmem:[#allocation2 + $0xc8] sm:$0xf]
    %v88 = vld [vmem:[#allocation2 + $0xcc] sm:$0xff]
    %v89 = vld [vmem:[#allocation2 + $0xd4] sm:$0xf]
    %v90 = vld [vmem:[#allocation2 + $0xd8] sm:$0xff]
    %v91 = vld [vmem:[#allocation2 + $0xe0] sm:$0xf]
    %v92 = vld [vmem:[#allocation2 + $0xe4] sm:$0xff]
    %v93 = vld [vmem:[#allocation2 + $0xec] sm:$0xf]
    %v94 = vld [vmem:[#allocation2 + $0xf0] sm:$0xff]
    %v95 = vld [vmem:[#allocation2 + $0xf8] sm:$0xf]
    %v96 = vld [vmem:[#allocation2 + $0xfc] sm:$0xff]
    %v97 = vld [vmem:[#allocation2 + $0x104] sm:$0xf]
    %v98 = vld [vmem:[#allocation2 + $0x108] sm:$0xff]
    %v99 = vld [vmem:[#allocation2 + $0x110] sm:$0xf]
    %v100 = vld [vmem:[#allocation2 + $0x114] sm:$0xff]
    %v101 = vld [vmem:[#allocation2 + $0x11c] sm:$0xf]
    %v102 = vld [vmem:[#allocation2 + $0x120] sm:$0xff]
    %v103 = vld [vmem:[#allocation2 + $0x128] sm:$0xf]
    %v104 = vld [vmem:[#allocation2 + $0x12c] sm:$0xff]
    %v105 = vld [vmem:[#allocation2 + $0x134] sm:$0xf]
    %v106 = vld [vmem:[#allocation2 + $0x138] sm:$0xff]
    %v107 = vld [vmem:[#allocation2 + $0x140] sm:$0xf]
    %v108 = vld [vmem:[#allocation2 + $0x144] sm:$0xff]
    %v109 = vld [vmem:[#allocation2 + $0x14c] sm:$0xf]
    %v110 = vld [vmem:[#allocation2 + $0x150] sm:$0xff]
    %v111 = vld [vmem:[#allocation2 + $0x158] sm:$0xf]
    %v112 = vld [vmem:[#allocation2 + $0x15c] sm:$0xff]
    %v113 = vld [vmem:[#allocation2 + $0x164] sm:$0xf]
    %v114 = vld [vmem:[#allocation2 + $0x168] sm:$0xff]
    %v115 = vld [vmem:[#allocation2 + $0x170] sm:$0xf]
    %v116 = vld [vmem:[#allocation2 + $0x174] sm:$0xff]
    %v117 = vld [vmem:[#allocation2 + $0x17c] sm:$0xf]
    %v118 = vld [vmem:[#allocation2 + $0x180] sm:$0xff]
    %v119 = vld [vmem:[#allocation2 + $0x188] sm:$0xf]
    %v120 = vld [vmem:[#allocation2 + $0x18c] sm:$0xff]
    %v121 = vld [vmem:[#allocation2 + $0x194] sm:$0xf]
    %v122 = vld [vmem:[#allocation2 + $0x198] sm:$0xff]
    %v123 = vld [vmem:[#allocation2 + $0x1a0] sm:$0xf]
    %v124 = vld [vmem:[#allocation2 + $0x1a4] sm:$0xff]
    %v125 = vld [vmem:[#allocation2 + $0x1ac] sm:$0xf]
    %v126 = vld [vmem:[#allocation2 + $0x1b0] sm:$0xff]
    %v127 = vld [vmem:[#allocation2 + $0x1b8] sm:$0xf]
    %v128 = vld [vmem:[#allocation2 + $0x1bc] sm:$0xff]
    %v129 = vld [vmem:[#allocation2 + $0x1c4] sm:$0xf]
    %v130 = vld [vmem:[#allocation2 + $0x1c8] sm:$0xff]
    %v131 = vld [vmem:[#allocation2 + $0x1d0] sm:$0xf]
    %v132 = vld [vmem:[#allocation2 + $0x1d4] sm:$0xff]
    %v133 = vld [vmem:[#allocation2 + $0x1dc] sm:$0xf]
    %v134 = vld [vmem:[#allocation2 + $0x1e0] sm:$0xff]
    %v135 = vld [vmem:[#allocation2 + $0x1e8] sm:$0xf]
    %v136 = vld [vmem:[#allocation2 + $0x1ec] sm:$0xff]
    %v137 = vld [vmem:[#allocation2 + $0x1f4] sm:$0xf]
    %v138 = vld [vmem:[#allocation2 + $0x1f8] sm:$0xff]
    %v139 = vld [vmem:[#allocation2 + $0x200] sm:$0xf]
    %v140 = vld [vmem:[#allocation2 + $0x204] sm:$0xff]
    %v141 = vld [vmem:[#allocation2 + $0x20c] sm:$0xf]
    %v142 = vld [vmem:[#allocation2 + $0x210] sm:$0xff]
    %v143 = vld [vmem:[#allocation2 + $0x218] sm:$0xf]
    %v144 = vld [vmem:[#allocation2 + $0x21c] sm:$0xff]
    %v145 = vld [vmem:[#allocation2 + $0x224] sm:$0xf]
    %v146 = vld [vmem:[#allocation2 + $0x228] sm:$0xff]
    %v147 = vld [vmem:[#allocation2 + $0x230] sm:$0xf]
    %v148 = vld [vmem:[#allocation2 + $0x234] sm:$0xff]
    %v149 = vld [vmem:[#allocation2 + $0x23c] sm:$0xf]
    %v150 = vld [vmem:[#allocation2 + $0x240] sm:$0xff]
    %v151 = vld [vmem:[#allocation2 + $0x248] sm:$0xf]
    %v152 = vld [vmem:[#allocation2 + $0x24c] sm:$0xff]
    %v153 = vld [vmem:[#allocation2 + $0x254] sm:$0xf]
    %v154 = vld [vmem:[#allocation2 + $0x258] sm:$0xff]
    %v155 = vld [vmem:[#allocation2 + $0x260] sm:$0xf]
    %v156 = vld [vmem:[#allocation2 + $0x264] sm:$0xff]
    %v157 = vld [vmem:[#allocation2 + $0x26c] sm:$0xf]
    %v158 = vld [vmem:[#allocation2 + $0x270] sm:$0xff]
    %v159 = vld [vmem:[#allocation2 + $0x278] sm:$0xf]
    %v160 = vld [vmem:[#allocation2 + $0x27c] sm:$0xff]
    %v161 = vld [vmem:[#allocation2 + $0x284] sm:$0xf]
    %v162 = vld [vmem:[#allocation2 + $0x288] sm:$0xff]
    %v163 = vld [vmem:[#allocation2 + $0x290] sm:$0xf]
    %v164 = vld [vmem:[#allocation2 + $0x294] sm:$0xff]
    %v165 = vld [vmem:[#allocation2 + $0x29c] sm:$0xf]
    %v166 = vld [vmem:[#allocation2 + $0x2a0] sm:$0xff]
    %v167 = vld [vmem:[#allocation2 + $0x2a8] sm:$0xf]
    %v168 = vld [vmem:[#allocation2 + $0x2ac] sm:$0xff]
    %v169 = vld [vmem:[#allocation2 + $0x2b4] sm:$0xf]
    %v170 = vld [vmem:[#allocation2 + $0x2b8] sm:$0xff]
    %v171 = vld [vmem:[#allocation2 + $0x2c0] sm:$0xf]
    %v172 = vld [vmem:[#allocation2 + $0x2c4] sm:$0xff]
    %v173 = vld [vmem:[#allocation2 + $0x2cc] sm:$0xf]
    %v174 = vld [vmem:[#allocation2 + $0x2d0] sm:$0xff]
    %v175 = vld [vmem:[#allocation2 + $0x2d8] sm:$0xf]
    %v176 = vld [vmem:[#allocation2 + $0x2dc] sm:$0xff]
    %v177 = vld [vmem:[#allocation2 + $0x2e4] sm:$0xf]
    %v178 = vld [vmem:[#allocation2 + $0x2e8] sm:$0xff]
    %v179 = vld [vmem:[#allocation2 + $0x2f0] sm:$0xf]
    %v180 = vld [vmem:[#allocation2 + $0x2f4] sm:$0xff]
    %v181 = vld [vmem:[#allocation2 + $0x2fc] sm:$0xf]
    %v182 = vld [vmem:[#allocation2 + $0x300] sm:$0xff]
    %v183 = vld [vmem:[#allocation2 + $0x308] sm:$0xf]
    %v184 = vld [vmem:[#allocation2 + $0x30c] sm:$0xff]
    %v185 = vld [vmem:[#allocation2 + $0x314] sm:$0xf]
    %v186 = vld [vmem:[#allocation2 + $0x318] sm:$0xff]
    %v187 = vld [vmem:[#allocation2 + $0x320] sm:$0xf]
    %v188 = vld [vmem:[#allocation2 + $0x324] sm:$0xff]
    %v189 = vld [vmem:[#allocation2 + $0x32c] sm:$0xf]
    %v190 = vld [vmem:[#allocation2 + $0x330] sm:$0xff]
    %v191 = vld [vmem:[#allocation2 + $0x338] sm:$0xf]
    %v192 = vld [vmem:[#allocation2 + $0x33c] sm:$0xff]
    %v193 = vld [vmem:[#allocation2 + $0x344] sm:$0xf]
    %v194 = vld [vmem:[#allocation2 + $0x348] sm:$0xff]
    %v195 = vld [vmem:[#allocation2 + $0x350] sm:$0xf]
    %v196 = vld [vmem:[#allocation2 + $0x354] sm:$0xff]
    %v197 = vld [vmem:[#allocation2 + $0x35c] sm:$0xf]
    %v198 = vld [vmem:[#allocation2 + $0x360] sm:$0xff]
    %v199 = vld [vmem:[#allocation2 + $0x368] sm:$0xf]
    %v200 = vld [vmem:[#allocation2 + $0x36c] sm:$0xff]
    %v201 = vld [vmem:[#allocation2 + $0x374] sm:$0xf]
    %v202 = vld [vmem:[#allocation2 + $0x378] sm:$0xff]
    %v203 = vld [vmem:[#allocation2 + $0x380] sm:$0xf]
    %v204 = vld [vmem:[#allocation2 + $0x384] sm:$0xff]
    %v205 = vld [vmem:[#allocation2 + $0x38c] sm:$0xf]
    %v206 = vld [vmem:[#allocation2 + $0x390] sm:$0xff]
    %v207 = vld [vmem:[#allocation2 + $0x398] sm:$0xf]
    %v208 = vld [vmem:[#allocation2 + $0x39c] sm:$0xff]
    %v209 = vld [vmem:[#allocation2 + $0x3a4] sm:$0xf]
    %v210 = vld [vmem:[#allocation2 + $0x3a8] sm:$0xff]
    %v211 = vld [vmem:[#allocation2 + $0x3b0] sm:$0xf]
    %v212 = vld [vmem:[#allocation2 + $0x3b4] sm:$0xff]
    %v213 = vld [vmem:[#allocation2 + $0x3bc] sm:$0xf]
    %v214 = vld [vmem:[#allocation2 + $0x3c0] sm:$0xff]
    %v215 = vld [vmem:[#allocation2 + $0x3c8] sm:$0xf]
    %v216 = vld [vmem:[#allocation2 + $0x3cc] sm:$0xff]
    %v217 = vld [vmem:[#allocation2 + $0x3d4] sm:$0xf]
    %v218 = vld [vmem:[#allocation2 + $0x3d8] sm:$0xff]
    %v219 = vld [vmem:[#allocation2 + $0x3e0] sm:$0xf]
    %v220 = vld [vmem:[#allocation2 + $0x3e4] sm:$0xff]
    %v221 = vld [vmem:[#allocation2 + $0x3ec] sm:$0xf]
    %v222 = vld [vmem:[#allocation2 + $0x3f0] sm:$0xff]
    %v223 = vld [vmem:[#allocation2 + $0x3f8] sm:$0xf]
    %v224 = vld [vmem:[#allocation2 + $0x3fc] sm:$0xff]
    %v225 = vld [vmem:[#allocation2 + $0x404] sm:$0xf]
    %v226 = vld [vmem:[#allocation2 + $0x408] sm:$0xff]
    %v227 = vld [vmem:[#allocation2 + $0x410] sm:$0xf]
    %v228 = vld [vmem:[#allocation2 + $0x414] sm:$0xff]
    %v229 = vld [vmem:[#allocation2 + $0x41c] sm:$0xf]
    %v230 = vld [vmem:[#allocation2 + $0x420] sm:$0xff]
    %v231 = vld [vmem:[#allocation2 + $0x428] sm:$0xf]
    %v232 = vld [vmem:[#allocation2 + $0x42c] sm:$0xff]
    %v233 = vld [vmem:[#allocation2 + $0x434] sm:$0xf]
    %v234 = vld [vmem:[#allocation2 + $0x438] sm:$0xff]
    %v235 = vld [vmem:[#allocation2 + $0x440] sm:$0xf]
    %v236 = vld [vmem:[#allocation2 + $0x444] sm:$0xff]
    %v237 = vld [vmem:[#allocation2 + $0x44c] sm:$0xf]
    %v238 = vld [vmem:[#allocation2 + $0x450] sm:$0xff]
    %v239 = vld [vmem:[#allocation2 + $0x458] sm:$0xf]
    %v240 = vld [vmem:[#allocation2 + $0x45c] sm:$0xff]
    %v241 = vld [vmem:[#allocation2 + $0x464] sm:$0xf]
    %v242 = vld [vmem:[#allocation2 + $0x468] sm:$0xff]
    %v243 = vld [vmem:[#allocation2 + $0x470] sm:$0xf]
    %v244 = vld [vmem:[#allocation2 + $0x474] sm:$0xff]
    %v245 = vld [vmem:[#allocation2 + $0x47c] sm:$0xf]
    %v246 = vld [vmem:[%s4] ss:$8 sm:$0x7]
    %v248 = vlaneseq
    %v249 = vshrl.u32 %v248, 7
    %v250 = vsub.s32 0, %v249
    %v251 = vrot.slane %v246, %v250
    %v252 = vlaneseq
    %v253 = vshrl.u32 %v252, 7
    %v254 = vsub.s32 1, %v253
    %v255 = vrot.slane %v246, %v254
    %v256 = vlaneseq
    %v257 = vshrl.u32 %v256, 7
    %v258 = vsub.s32 2, %v257
    %v259 = vrot.slane %v246, %v258
    %v455 = vunpack.c.l.b16 %v54
    %v456 = vunpack.c.h.b16 %v54
    %v457 = vunpack.c.l.b16 %v55
    %v458 = vunpack.c.l.b16 %v56
    %v459 = vunpack.c.h.b16 %v56
    %v460 = vunpack.c.l.b16 %v57
    %v461 = vunpack.c.l.b16 %v58
    %v462 = vunpack.c.h.b16 %v58
    %v463 = vunpack.c.l.b16 %v59
    %v464 = vunpack.c.l.b16 %v60
    %v465 = vunpack.c.h.b16 %v60
    %v466 = vunpack.c.l.b16 %v61
    %v467 = vunpack.c.l.b16 %v62
    %v468 = vunpack.c.h.b16 %v62
    %v469 = vunpack.c.l.b16 %v63
    %v470 = vunpack.c.l.b16 %v64
    %v471 = vunpack.c.h.b16 %v64
    %v472 = vunpack.c.l.b16 %v65
    %v473 = vunpack.c.l.b16 %v66
    %v474 = vunpack.c.h.b16 %v66
    %v475 = vunpack.c.l.b16 %v67
    %v476 = vunpack.c.l.b16 %v68
    %v477 = vunpack.c.h.b16 %v68
    %v478 = vunpack.c.l.b16 %v69
    %v479 = vunpack.c.l.b16 %v70
    %v480 = vunpack.c.h.b16 %v70
    %v481 = vunpack.c.l.b16 %v71
    %v482 = vunpack.c.l.b16 %v72
    %v483 = vunpack.c.h.b16 %v72
    %v484 = vunpack.c.l.b16 %v73
    %v485 = vunpack.c.l.b16 %v74
    %v486 = vunpack.c.h.b16 %v74
    %v487 = vunpack.c.l.b16 %v75
    %v488 = vunpack.c.l.b16 %v76
    %v489 = vunpack.c.h.b16 %v76
    %v490 = vunpack.c.l.b16 %v77
    %v491 = vunpack.c.l.b16 %v78
    %v492 = vunpack.c.h.b16 %v78
    %v493 = vunpack.c.l.b16 %v79
    %v494 = vunpack.c.l.b16 %v80
    %v495 = vunpack.c.h.b16 %v80
    %v496 = vunpack.c.l.b16 %v81
    %v497 = vunpack.c.l.b16 %v82
    %v498 = vunpack.c.h.b16 %v82
    %v499 = vunpack.c.l.b16 %v83
    %v500 = vunpack.c.l.b16 %v84
    %v501 = vunpack.c.h.b16 %v84
    %v502 = vunpack.c.l.b16 %v85
    %v503 = vunpack.c.l.b16 %v86
    %v504 = vunpack.c.h.b16 %v86
    %v505 = vunpack.c.l.b16 %v87
    %v506 = vunpack.c.l.b16 %v88
    %v507 = vunpack.c.h.b16 %v88
    %v508 = vunpack.c.l.b16 %v89
    %v509 = vunpack.c.l.b16 %v90
    %v510 = vunpack.c.h.b16 %v90
    %v511 = vunpack.c.l.b16 %v91
    %v512 = vunpack.c.l.b16 %v92
    %v513 = vunpack.c.h.b16 %v92
    %v514 = vunpack.c.l.b16 %v93
    %v515 = vunpack.c.l.b16 %v94
    %v516 = vunpack.c.h.b16 %v94
    %v517 = vunpack.c.l.b16 %v95
    %v518 = vunpack.c.l.b16 %v96
    %v519 = vunpack.c.h.b16 %v96
    %v520 = vunpack.c.l.b16 %v97
    %v521 = vunpack.c.l.b16 %v98
    %v522 = vunpack.c.h.b16 %v98
    %v523 = vunpack.c.l.b16 %v99
    %v524 = vunpack.c.l.b16 %v100
    %v525 = vunpack.c.h.b16 %v100
    %v526 = vunpack.c.l.b16 %v101
    %v527 = vunpack.c.l.b16 %v102
    %v528 = vunpack.c.h.b16 %v102
    %v529 = vunpack.c.l.b16 %v103
    %v530 = vunpack.c.l.b16 %v104
    %v531 = vunpack.c.h.b16 %v104
    %v532 = vunpack.c.l.b16 %v105
    %v533 = vunpack.c.l.b16 %v106
    %v534 = vunpack.c.h.b16 %v106
    %v535 = vunpack.c.l.b16 %v107
    %v536 = vunpack.c.l.b16 %v108
    %v537 = vunpack.c.h.b16 %v108
    %v538 = vunpack.c.l.b16 %v109
    %v539 = vunpack.c.l.b16 %v110
    %v540 = vunpack.c.h.b16 %v110
    %v541 = vunpack.c.l.b16 %v111
    %v542 = vunpack.c.l.b16 %v112
    %v543 = vunpack.c.h.b16 %v112
    %v544 = vunpack.c.l.b16 %v113
    %v545 = vunpack.c.l.b16 %v114
    %v546 = vunpack.c.h.b16 %v114
    %v547 = vunpack.c.l.b16 %v115
    %v548 = vunpack.c.l.b16 %v116
    %v549 = vunpack.c.h.b16 %v116
    %v550 = vunpack.c.l.b16 %v117
    %v551 = vunpack.c.l.b16 %v118
    %v552 = vunpack.c.h.b16 %v118
    %v553 = vunpack.c.l.b16 %v119
    %v554 = vunpack.c.l.b16 %v120
    %v555 = vunpack.c.h.b16 %v120
    %v556 = vunpack.c.l.b16 %v121
    %v557 = vunpack.c.l.b16 %v122
    %v558 = vunpack.c.h.b16 %v122
    %v559 = vunpack.c.l.b16 %v123
    %v560 = vunpack.c.l.b16 %v124
    %v561 = vunpack.c.h.b16 %v124
    %v562 = vunpack.c.l.b16 %v125
    %v563 = vunpack.c.l.b16 %v126
    %v564 = vunpack.c.h.b16 %v126
    %v565 = vunpack.c.l.b16 %v127
    %v566 = vunpack.c.l.b16 %v128
    %v567 = vunpack.c.h.b16 %v128
    %v568 = vunpack.c.l.b16 %v129
    %v569 = vunpack.c.l.b16 %v130
    %v570 = vunpack.c.h.b16 %v130
    %v571 = vunpack.c.l.b16 %v131
    %v572 = vunpack.c.l.b16 %v132
    %v573 = vunpack.c.h.b16 %v132
    %v574 = vunpack.c.l.b16 %v133
    %v575 = vunpack.c.l.b16 %v134
    %v576 = vunpack.c.h.b16 %v134
    %v577 = vunpack.c.l.b16 %v135
    %v578 = vunpack.c.l.b16 %v136
    %v579 = vunpack.c.h.b16 %v136
    %v580 = vunpack.c.l.b16 %v137
    %v581 = vunpack.c.l.b16 %v138
    %v582 = vunpack.c.h.b16 %v138
    %v583 = vunpack.c.l.b16 %v139
    %v584 = vunpack.c.l.b16 %v140
    %v585 = vunpack.c.h.b16 %v140
    %v586 = vunpack.c.l.b16 %v141
    %v587 = vunpack.c.l.b16 %v142
    %v588 = vunpack.c.h.b16 %v142
    %v589 = vunpack.c.l.b16 %v143
    %v590 = vunpack.c.l.b16 %v144
    %v591 = vunpack.c.h.b16 %v144
    %v592 = vunpack.c.l.b16 %v145
    %v593 = vunpack.c.l.b16 %v146
    %v594 = vunpack.c.h.b16 %v146
    %v595 = vunpack.c.l.b16 %v147
    %v596 = vunpack.c.l.b16 %v148
    %v597 = vunpack.c.h.b16 %v148
    %v598 = vunpack.c.l.b16 %v149
    %v599 = vunpack.c.l.b16 %v150
    %v600 = vunpack.c.h.b16 %v150
    %v601 = vunpack.c.l.b16 %v151
    %v602 = vunpack.c.l.b16 %v152
    %v603 = vunpack.c.h.b16 %v152
    %v604 = vunpack.c.l.b16 %v153
    %v605 = vunpack.c.l.b16 %v154
    %v606 = vunpack.c.h.b16 %v154
    %v607 = vunpack.c.l.b16 %v155
    %v608 = vunpack.c.l.b16 %v156
    %v609 = vunpack.c.h.b16 %v156
    %v610 = vunpack.c.l.b16 %v157
    %v611 = vunpack.c.l.b16 %v158
    %v612 = vunpack.c.h.b16 %v158
    %v613 = vunpack.c.l.b16 %v159
    %v614 = vunpack.c.l.b16 %v160
    %v615 = vunpack.c.h.b16 %v160
    %v616 = vunpack.c.l.b16 %v161
    %v617 = vunpack.c.l.b16 %v162
    %v618 = vunpack.c.h.b16 %v162
    %v619 = vunpack.c.l.b16 %v163
    %v620 = vunpack.c.l.b16 %v164
    %v621 = vunpack.c.h.b16 %v164
    %v622 = vunpack.c.l.b16 %v165
    %v623 = vunpack.c.l.b16 %v166
    %v624 = vunpack.c.h.b16 %v166
    %v625 = vunpack.c.l.b16 %v167
    %v626 = vunpack.c.l.b16 %v168
    %v627 = vunpack.c.h.b16 %v168
    %v628 = vunpack.c.l.b16 %v169
    %v629 = vunpack.c.l.b16 %v170
    %v630 = vunpack.c.h.b16 %v170
    %v631 = vunpack.c.l.b16 %v171
    %v632 = vunpack.c.l.b16 %v172
    %v633 = vunpack.c.h.b16 %v172
    %v634 = vunpack.c.l.b16 %v173
    %v635 = vunpack.c.l.b16 %v174
    %v636 = vunpack.c.h.b16 %v174
    %v637 = vunpack.c.l.b16 %v175
    %v638 = vunpack.c.l.b16 %v176
    %v639 = vunpack.c.h.b16 %v176
    %v640 = vunpack.c.l.b16 %v177
    %v641 = vunpack.c.l.b16 %v178
    %v642 = vunpack.c.h.b16 %v178
    %v643 = vunpack.c.l.b16 %v179
    %v644 = vunpack.c.l.b16 %v180
    %v645 = vunpack.c.h.b16 %v180
    %v646 = vunpack.c.l.b16 %v181
    %v647 = vunpack.c.l.b16 %v182
    %v648 = vunpack.c.h.b16 %v182
    %v649 = vunpack.c.l.b16 %v183
    %v650 = vunpack.c.l.b16 %v184
    %v651 = vunpack.c.h.b16 %v184
    %v652 = vunpack.c.l.b16 %v185
    %v653 = vunpack.c.l.b16 %v186
    %v654 = vunpack.c.h.b16 %v186
    %v655 = vunpack.c.l.b16 %v187
    %v656 = vunpack.c.l.b16 %v188
    %v657 = vunpack.c.h.b16 %v188
    %v658 = vunpack.c.l.b16 %v189
    %v659 = vunpack.c.l.b16 %v190
    %v660 = vunpack.c.h.b16 %v190
    %v661 = vunpack.c.l.b16 %v191
    %v662 = vunpack.c.l.b16 %v192
    %v663 = vunpack.c.h.b16 %v192
    %v664 = vunpack.c.l.b16 %v193
    %v665 = vunpack.c.l.b16 %v194
    %v666 = vunpack.c.h.b16 %v194
    %v667 = vunpack.c.l.b16 %v195
    %v668 = vunpack.c.l.b16 %v196
    %v669 = vunpack.c.h.b16 %v196
    %v670 = vunpack.c.l.b16 %v197
    %v671 = vunpack.c.l.b16 %v198
    %v672 = vunpack.c.h.b16 %v198
    %v673 = vunpack.c.l.b16 %v199
    %v674 = vunpack.c.l.b16 %v200
    %v675 = vunpack.c.h.b16 %v200
    %v676 = vunpack.c.l.b16 %v201
    %v677 = vunpack.c.l.b16 %v202
    %v678 = vunpack.c.h.b16 %v202
    %v679 = vunpack.c.l.b16 %v203
    %v680 = vunpack.c.l.b16 %v204
    %v681 = vunpack.c.h.b16 %v204
    %v682 = vunpack.c.l.b16 %v205
    %v683 = vunpack.c.l.b16 %v206
    %v684 = vunpack.c.h.b16 %v206
    %v685 = vunpack.c.l.b16 %v207
    %v686 = vunpack.c.l.b16 %v208
    %v687 = vunpack.c.h.b16 %v208
    %v688 = vunpack.c.l.b16 %v209
    %v689 = vunpack.c.l.b16 %v210
    %v690 = vunpack.c.h.b16 %v210
    %v691 = vunpack.c.l.b16 %v211
    %v692 = vunpack.c.l.b16 %v212
    %v693 = vunpack.c.h.b16 %v212
    %v694 = vunpack.c.l.b16 %v213
    %v695 = vunpack.c.l.b16 %v214
    %v696 = vunpack.c.h.b16 %v214
    %v697 = vunpack.c.l.b16 %v215
    %v698 = vunpack.c.l.b16 %v216
    %v699 = vunpack.c.h.b16 %v216
    %v700 = vunpack.c.l.b16 %v217
    %v701 = vunpack.c.l.b16 %v218
    %v702 = vunpack.c.h.b16 %v218
    %v703 = vunpack.c.l.b16 %v219
    %v704 = vunpack.c.l.b16 %v220
    %v705 = vunpack.c.h.b16 %v220
    %v706 = vunpack.c.l.b16 %v221
    %v707 = vunpack.c.l.b16 %v222
    %v708 = vunpack.c.h.b16 %v222
    %v709 = vunpack.c.l.b16 %v223
    %v710 = vunpack.c.l.b16 %v224
    %v711 = vunpack.c.h.b16 %v224
    %v712 = vunpack.c.l.b16 %v225
    %v713 = vunpack.c.l.b16 %v226
    %v714 = vunpack.c.h.b16 %v226
    %v715 = vunpack.c.l.b16 %v227
    %v716 = vunpack.c.l.b16 %v228
    %v717 = vunpack.c.h.b16 %v228
    %v718 = vunpack.c.l.b16 %v229
    %v719 = vunpack.c.l.b16 %v230
    %v720 = vunpack.c.h.b16 %v230
    %v721 = vunpack.c.l.b16 %v231
    %v722 = vunpack.c.l.b16 %v232
    %v723 = vunpack.c.h.b16 %v232
    %v724 = vunpack.c.l.b16 %v233
    %v725 = vunpack.c.l.b16 %v234
    %v726 = vunpack.c.h.b16 %v234
    %v727 = vunpack.c.l.b16 %v235
    %v728 = vunpack.c.l.b16 %v236
    %v729 = vunpack.c.h.b16 %v236
    %v730 = vunpack.c.l.b16 %v237
    %v731 = vunpack.c.l.b16 %v238
    %v732 = vunpack.c.h.b16 %v238
    %v733 = vunpack.c.l.b16 %v239
    %v734 = vunpack.c.l.b16 %v240
    %v735 = vunpack.c.h.b16 %v240
    %v736 = vunpack.c.l.b16 %v241
    %v737 = vunpack.c.l.b16 %v242
    %v738 = vunpack.c.h.b16 %v242
    %v739 = vunpack.c.l.b16 %v243
    %v740 = vunpack.c.l.b16 %v244
    %v741 = vunpack.c.h.b16 %v244
    %v742 = vunpack.c.l.b16 %v245
    %v743 = vpack.c.b16 %v458, %v455
    %v744 = vpack.c.b16 %v459, %v456
    %v745 = vpack.c.b16 %v460, %v457
    %v746 = vpack.c.b16 %v464, %v461
    %v747 = vpack.c.b16 %v465, %v462
    %v748 = vpack.c.b16 %v466, %v463
    %v749 = vpack.c.b16 %v470, %v467
    %v750 = vpack.c.b16 %v471, %v468
    %v751 = vpack.c.b16 %v472, %v469
    %v752 = vpack.c.b16 %v476, %v473
    %v753 = vpack.c.b16 %v477, %v474
    %v754 = vpack.c.b16 %v478, %v475
    %v755 = vpack.c.b16 %v482, %v479
    %v756 = vpack.c.b16 %v483, %v480
    %v757 = vpack.c.b16 %v484, %v481
    %v758 = vpack.c.b16 %v488, %v485
    %v759 = vpack.c.b16 %v489, %v486
    %v760 = vpack.c.b16 %v490, %v487
    %v761 = vpack.c.b16 %v494, %v491
    %v762 = vpack.c.b16 %v495, %v492
    %v763 = vpack.c.b16 %v496, %v493
    %v764 = vpack.c.b16 %v500, %v497
    %v765 = vpack.c.b16 %v501, %v498
    %v766 = vpack.c.b16 %v502, %v499
    %v767 = vpack.c.b16 %v506, %v503
    %v768 = vpack.c.b16 %v507, %v504
    %v769 = vpack.c.b16 %v508, %v505
    %v770 = vpack.c.b16 %v512, %v509
    %v771 = vpack.c.b16 %v513, %v510
    %v772 = vpack.c.b16 %v514, %v511
    %v773 = vpack.c.b16 %v518, %v515
    %v774 = vpack.c.b16 %v519, %v516
    %v775 = vpack.c.b16 %v520, %v517
    %v776 = vpack.c.b16 %v524, %v521
    %v777 = vpack.c.b16 %v525, %v522
    %v778 = vpack.c.b16 %v526, %v523
    %v779 = vpack.c.b16 %v530, %v527
    %v780 = vpack.c.b16 %v531, %v528
    %v781 = vpack.c.b16 %v532, %v529
    %v782 = vpack.c.b16 %v536, %v533
    %v783 = vpack.c.b16 %v537, %v534
    %v784 = vpack.c.b16 %v538, %v535
    %v785 = vpack.c.b16 %v542, %v539
    %v786 = vpack.c.b16 %v543, %v540
    %v787 = vpack.c.b16 %v544, %v541
    %v788 = vpack.c.b16 %v548, %v545
    %v789 = vpack.c.b16 %v549, %v546
    %v790 = vpack.c.b16 %v550, %v547
    %v791 = vpack.c.b16 %v554, %v551
    %v792 = vpack.c.b16 %v555, %v552
    %v793 = vpack.c.b16 %v556, %v553
    %v794 = vpack.c.b16 %v560, %v557
    %v795 = vpack.c.b16 %v561, %v558
    %v796 = vpack.c.b16 %v562, %v559
    %v797 = vpack.c.b16 %v566, %v563
    %v798 = vpack.c.b16 %v567, %v564
    %v799 = vpack.c.b16 %v568, %v565
    %v800 = vpack.c.b16 %v572, %v569
    %v801 = vpack.c.b16 %v573, %v570
    %v802 = vpack.c.b16 %v574, %v571
    %v803 = vpack.c.b16 %v578, %v575
    %v804 = vpack.c.b16 %v579, %v576
    %v805 = vpack.c.b16 %v580, %v577
    %v806 = vpack.c.b16 %v584, %v581
    %v807 = vpack.c.b16 %v585, %v582
    %v808 = vpack.c.b16 %v586, %v583
    %v809 = vpack.c.b16 %v590, %v587
    %v810 = vpack.c.b16 %v591, %v588
    %v811 = vpack.c.b16 %v592, %v589
    %v812 = vpack.c.b16 %v596, %v593
    %v813 = vpack.c.b16 %v597, %v594
    %v814 = vpack.c.b16 %v598, %v595
    %v815 = vpack.c.b16 %v602, %v599
    %v816 = vpack.c.b16 %v603, %v600
    %v817 = vpack.c.b16 %v604, %v601
    %v818 = vpack.c.b16 %v608, %v605
    %v819 = vpack.c.b16 %v609, %v606
    %v820 = vpack.c.b16 %v610, %v607
    %v821 = vpack.c.b16 %v614, %v611
    %v822 = vpack.c.b16 %v615, %v612
    %v823 = vpack.c.b16 %v616, %v613
    %v824 = vpack.c.b16 %v620, %v617
    %v825 = vpack.c.b16 %v621, %v618
    %v826 = vpack.c.b16 %v622, %v619
    %v827 = vpack.c.b16 %v626, %v623
    %v828 = vpack.c.b16 %v627, %v624
    %v829 = vpack.c.b16 %v628, %v625
    %v830 = vpack.c.b16 %v632, %v629
    %v831 = vpack.c.b16 %v633, %v630
    %v832 = vpack.c.b16 %v634, %v631
    %v833 = vpack.c.b16 %v638, %v635
    %v834 = vpack.c.b16 %v639, %v636
    %v835 = vpack.c.b16 %v640, %v637
    %v836 = vpack.c.b16 %v644, %v641
    %v837 = vpack.c.b16 %v645, %v642
    %v838 = vpack.c.b16 %v646, %v643
    %v839 = vpack.c.b16 %v650, %v647
    %v840 = vpack.c.b16 %v651, %v648
    %v841 = vpack.c.b16 %v652, %v649
    %v842 = vpack.c.b16 %v656, %v653
    %v843 = vpack.c.b16 %v657, %v654
    %v844 = vpack.c.b16 %v658, %v655
    %v845 = vpack.c.b16 %v662, %v659
    %v846 = vpack.c.b16 %v663, %v660
    %v847 = vpack.c.b16 %v664, %v661
    %v848 = vpack.c.b16 %v668, %v665
    %v849 = vpack.c.b16 %v669, %v666
    %v850 = vpack.c.b16 %v670, %v667
    %v851 = vpack.c.b16 %v674, %v671
    %v852 = vpack.c.b16 %v675, %v672
    %v853 = vpack.c.b16 %v676, %v673
    %v854 = vpack.c.b16 %v680, %v677
    %v855 = vpack.c.b16 %v681, %v678
    %v856 = vpack.c.b16 %v682, %v679
    %v857 = vpack.c.b16 %v686, %v683
    %v858 = vpack.c.b16 %v687, %v684
    %v859 = vpack.c.b16 %v688, %v685
    %v860 = vpack.c.b16 %v692, %v689
    %v861 = vpack.c.b16 %v693, %v690
    %v862 = vpack.c.b16 %v694, %v691
    %v863 = vpack.c.b16 %v698, %v695
    %v864 = vpack.c.b16 %v699, %v696
    %v865 = vpack.c.b16 %v700, %v697
    %v866 = vpack.c.b16 %v704, %v701
    %v867 = vpack.c.b16 %v705, %v702
    %v868 = vpack.c.b16 %v706, %v703
    %v869 = vpack.c.b16 %v710, %v707
    %v870 = vpack.c.b16 %v711, %v708
    %v871 = vpack.c.b16 %v712, %v709
    %v872 = vpack.c.b16 %v716, %v713
    %v873 = vpack.c.b16 %v717, %v714
    %v874 = vpack.c.b16 %v718, %v715
    %v875 = vpack.c.b16 %v722, %v719
    %v876 = vpack.c.b16 %v723, %v720
    %v877 = vpack.c.b16 %v724, %v721
    %v878 = vpack.c.b16 %v728, %v725
    %v879 = vpack.c.b16 %v729, %v726
    %v880 = vpack.c.b16 %v730, %v727
    %v881 = vpack.c.b16 %v734, %v731
    %v882 = vpack.c.b16 %v735, %v732
    %v883 = vpack.c.b16 %v736, %v733
    %v884 = vpack.c.b16 %v740, %v737
    %v885 = vpack.c.b16 %v741, %v738
    %v886 = vpack.c.b16 %v742, %v739
    %1031 = vmatprep.subr.bf16.mxu0 %v744
    %1032 = vmatpush1.bf16.msra.mxu0 %v743
    %1033 = vmatprep.subr.bf16.mxu0 %v747
    %1034 = vmatpush1.bf16.msra.mxu0 %v746
    %1035 = vmatprep.subr.bf16.mxu0 %v750
    %1036 = vmatpush1.bf16.msra.mxu0 %v749
    %1037 = vmatprep.subr.bf16.mxu0 %v753
    %1038 = vmatpush1.bf16.msra.mxu0 %v752
    %1039 = vmatprep.subr.bf16.mxu0 %v756
    %1040 = vmatpush1.bf16.msra.mxu0 %v755
    %1041 = vmatprep.subr.bf16.mxu0 %v759
    %1042 = vmatpush1.bf16.msra.mxu0 %v758
    %1043 = vmatprep.subr.bf16.mxu0 %v762
    %1044 = vmatpush1.bf16.msra.mxu0 %v761
    %1045 = vmatprep.subr.bf16.mxu0 %v765
    %1046 = vmatpush1.bf16.msra.mxu0 %v764
    %1047 = vmatprep.subr.bf16.mxu0 %v768
    %1048 = vmatpush1.bf16.msra.mxu0 %v767
    %1049 = vmatprep.subr.bf16.mxu0 %v771
    %1050 = vmatpush1.bf16.msra.mxu0 %v770
    %1051 = vmatprep.subr.bf16.mxu0 %v774
    %1052 = vmatpush1.bf16.msra.mxu0 %v773
    %1053 = vmatprep.subr.bf16.mxu0 %v777
    %1054 = vmatpush1.bf16.msra.mxu0 %v776
    %1055 = vmatprep.subr.bf16.mxu0 %v780
    %1056 = vmatpush1.bf16.msra.mxu0 %v779
    %1057 = vmatprep.subr.bf16.mxu0 %v783
    %1058 = vmatpush1.bf16.msra.mxu0 %v782
    %1059 = vmatprep.subr.bf16.mxu0 %v786
    %1060 = vmatpush1.bf16.msra.mxu0 %v785
    %1061 = vmatprep.subr.bf16.mxu0 %v789
    %1062 = vmatpush1.bf16.msra.mxu0 %v788
    %1063 = vmatprep.mubr.bf16.mxu0 %v49
    %1064 = vmatmul.mubr.bf16.gmra.mrb[0].mxu0 %v48
    %v1065 = vpop.f32.mrb[0].mxu0
    %v1066 = vadd.f32 %v251, %v1065
    %v1067 = vpop.f32.mrb[0].mxu0
    %v1068 = vadd.f32 %v255, %v1067
    %v1069 = vpop.f32.mrb[0].mxu0
    %v1070 = vadd.f32 %v251, %v1069
    %v1071 = vpop.f32.mrb[0].mxu0
    %v1072 = vadd.f32 %v255, %v1071
    %1073 = vdwg.mxu0
    %1074 = vmatprep.subr.bf16.mxu0 %v792
    %1075 = vmatpush1.bf16.msra.mxu0 %v791
    %1076 = vmatprep.subr.bf16.mxu0 %v795
    %1077 = vmatpush1.bf16.msra.mxu0 %v794
    %1078 = vmatprep.subr.bf16.mxu0 %v798
    %1079 = vmatpush1.bf16.msra.mxu0 %v797
    %1080 = vmatprep.subr.bf16.mxu0 %v801
    %1081 = vmatpush1.bf16.msra.mxu0 %v800
    %1082 = vmatprep.subr.bf16.mxu0 %v804
    %1083 = vmatpush1.bf16.msra.mxu0 %v803
    %1084 = vmatprep.subr.bf16.mxu0 %v807
    %1085 = vmatpush1.bf16.msra.mxu0 %v806
    %1086 = vmatprep.subr.bf16.mxu0 %v810
    %1087 = vmatpush1.bf16.msra.mxu0 %v809
    %1088 = vmatprep.subr.bf16.mxu0 %v813
    %1089 = vmatpush1.bf16.msra.mxu0 %v812
    %1090 = vmatprep.subr.bf16.mxu0 %v816
    %1091 = vmatpush1.bf16.msra.mxu0 %v815
    %1092 = vmatprep.subr.bf16.mxu0 %v819
    %1093 = vmatpush1.bf16.msra.mxu0 %v818
    %1094 = vmatprep.subr.bf16.mxu0 %v822
    %1095 = vmatpush1.bf16.msra.mxu0 %v821
    %1096 = vmatprep.subr.bf16.mxu0 %v825
    %1097 = vmatpush1.bf16.msra.mxu0 %v824
    %1098 = vmatprep.subr.bf16.mxu0 %v828
    %1099 = vmatpush1.bf16.msra.mxu0 %v827
    %1100 = vmatprep.subr.bf16.mxu0 %v831
    %1101 = vmatpush1.bf16.msra.mxu0 %v830
    %1102 = vmatprep.subr.bf16.mxu0 %v834
    %1103 = vmatpush1.bf16.msra.mxu0 %v833
    %1104 = vmatprep.subr.bf16.mxu0 %v837
    %1105 = vmatpush1.bf16.msra.mxu0 %v836
    %1106 = vmatprep.mubr.bf16.mxu0 %v51
    %1107 = vmatmul.mubr.bf16.gmra.mrb[0].mxu0 %v50
    %v1108 = vpop.f32.mrb[0].mxu0
    %v1109 = vadd.f32 %v1066, %v1108
    %v1110 = vpop.f32.mrb[0].mxu0
    %v1111 = vadd.f32 %v1068, %v1110
    %v1112 = vpop.f32.mrb[0].mxu0
    %v1113 = vadd.f32 %v1070, %v1112
    %v1114 = vpop.f32.mrb[0].mxu0
    %v1115 = vadd.f32 %v1072, %v1114
    %1116 = vdwg.mxu0
    %1117 = vmatprep.subr.bf16.mxu0 %v840
    %1118 = vmatpush1.bf16.msra.mxu0 %v839
    %1119 = vmatprep.subr.bf16.mxu0 %v843
    %1120 = vmatpush1.bf16.msra.mxu0 %v842
    %1121 = vmatprep.subr.bf16.mxu0 %v846
    %1122 = vmatpush1.bf16.msra.mxu0 %v845
    %1123 = vmatprep.subr.bf16.mxu0 %v849
    %1124 = vmatpush1.bf16.msra.mxu0 %v848
    %1125 = vmatprep.subr.bf16.mxu0 %v852
    %1126 = vmatpush1.bf16.msra.mxu0 %v851
    %1127 = vmatprep.subr.bf16.mxu0 %v855
    %1128 = vmatpush1.bf16.msra.mxu0 %v854
    %1129 = vmatprep.subr.bf16.mxu0 %v858
    %1130 = vmatpush1.bf16.msra.mxu0 %v857
    %1131 = vmatprep.subr.bf16.mxu0 %v861
    %1132 = vmatpush1.bf16.msra.mxu0 %v860
    %1133 = vmatprep.subr.bf16.mxu0 %v864
    %1134 = vmatpush1.bf16.msra.mxu0 %v863
    %1135 = vmatprep.subr.bf16.mxu0 %v867
    %1136 = vmatpush1.bf16.msra.mxu0 %v866
    %1137 = vmatprep.subr.bf16.mxu0 %v870
    %1138 = vmatpush1.bf16.msra.mxu0 %v869
    %1139 = vmatprep.subr.bf16.mxu0 %v873
    %1140 = vmatpush1.bf16.msra.mxu0 %v872
    %1141 = vmatprep.subr.bf16.mxu0 %v876
    %1142 = vmatpush1.bf16.msra.mxu0 %v875
    %1143 = vmatprep.subr.bf16.mxu0 %v879
    %1144 = vmatpush1.bf16.msra.mxu0 %v878
    %1145 = vmatprep.subr.bf16.mxu0 %v882
    %1146 = vmatpush1.bf16.msra.mxu0 %v881
    %1147 = vmatprep.subr.bf16.mxu0 %v885
    %1148 = vmatpush1.bf16.msra.mxu0 %v884
    %1149 = vmatprep.mubr.bf16.mxu0 %v53
    %1150 = vmatmul.mubr.bf16.gmra.mrb[0].mxu0 %v52
    %v1151 = vpop.f32.mrb[0].mxu0
    %v1152 = vadd.f32 %v1109, %v1151
    %v1153 = vpop.f32.mrb[0].mxu0
    %v1154 = vadd.f32 %v1111, %v1153
    %v1155 = vpop.f32.mrb[0].mxu0
    %v1156 = vadd.f32 %v1113, %v1155
    %v1157 = vpop.f32.mrb[0].mxu0
    %v1158 = vadd.f32 %v1115, %v1157
    %1159 = vdwg.mxu0
    %1160 = vmatprep.subr.bf16.mxu0 0
    %1161 = vmatpush1.bf16.msra.mxu0 %v745
    %1162 = vmatprep.subr.bf16.mxu0 0
    %1163 = vmatpush1.bf16.msra.mxu0 %v748
    %1164 = vmatprep.subr.bf16.mxu0 0
    %1165 = vmatpush1.bf16.msra.mxu0 %v751
    %1166 = vmatprep.subr.bf16.mxu0 0
    %1167 = vmatpush1.bf16.msra.mxu0 %v754
    %1168 = vmatprep.subr.bf16.mxu0 0
    %1169 = vmatpush1.bf16.msra.mxu0 %v757
    %1170 = vmatprep.subr.bf16.mxu0 0
    %1171 = vmatpush1.bf16.msra.mxu0 %v760
    %1172 = vmatprep.subr.bf16.mxu0 0
    %1173 = vmatpush1.bf16.msra.mxu0 %v763
    %1174 = vmatprep.subr.bf16.mxu0 0
    %1175 = vmatpush1.bf16.msra.mxu0 %v766
    %1176 = vmatprep.subr.bf16.mxu0 0
    %1177 = vmatpush1.bf16.msra.mxu0 %v769
    %1178 = vmatprep.subr.bf16.mxu0 0
    %1179 = vmatpush1.bf16.msra.mxu0 %v772
    %1180 = vmatprep.subr.bf16.mxu0 0
    %1181 = vmatpush1.bf16.msra.mxu0 %v775
    %1182 = vmatprep.subr.bf16.mxu0 0
    %1183 = vmatpush1.bf16.msra.mxu0 %v778
    %1184 = vmatprep.subr.bf16.mxu0 0
    %1185 = vmatpush1.bf16.msra.mxu0 %v781
    %1186 = vmatprep.subr.bf16.mxu0 0
    %1187 = vmatpush1.bf16.msra.mxu0 %v784
    %1188 = vmatprep.subr.bf16.mxu0 0
    %1189 = vmatpush1.bf16.msra.mxu0 %v787
    %1190 = vmatprep.subr.bf16.mxu0 0
    %1191 = vmatpush1.bf16.msra.mxu0 %v790
    %1192 = vmatprep.mubr.bf16.mxu0 %v49
    %1193 = vmatmul.mubr.bf16.gmra.mrb[0].mxu0 %v48
    %v1194 = vpop.f32.mrb[0].mxu0
    %v1195 = vadd.f32 %v259, %v1194
    %v1196 = vpop.f32.mrb[0].mxu0
    %v1197 = vpop.f32.mrb[0].mxu0
    %v1198 = vadd.f32 %v259, %v1197
    %v1199 = vpop.f32.mrb[0].mxu0
    %1200 = vdwg.mxu0
    %1201 = vmatprep.subr.bf16.mxu0 0
    %1202 = vmatpush1.bf16.msra.mxu0 %v793
    %1203 = vmatprep.subr.bf16.mxu0 0
    %1204 = vmatpush1.bf16.msra.mxu0 %v796
    %1205 = vmatprep.subr.bf16.mxu0 0
    %1206 = vmatpush1.bf16.msra.mxu0 %v799
    %1207 = vmatprep.subr.bf16.mxu0 0
    %1208 = vmatpush1.bf16.msra.mxu0 %v802
    %1209 = vmatprep.subr.bf16.mxu0 0
    %1210 = vmatpush1.bf16.msra.mxu0 %v805
    %1211 = vmatprep.subr.bf16.mxu0 0
    %1212 = vmatpush1.bf16.msra.mxu0 %v808
    %1213 = vmatprep.subr.bf16.mxu0 0
    %1214 = vmatpush1.bf16.msra.mxu0 %v811
    %1215 = vmatprep.subr.bf16.mxu0 0
    %1216 = vmatpush1.bf16.msra.mxu0 %v814
    %1217 = vmatprep.subr.bf16.mxu0 0
    %1218 = vmatpush1.bf16.msra.mxu0 %v817
    %1219 = vmatprep.subr.bf16.mxu0 0
    %1220 = vmatpush1.bf16.msra.mxu0 %v820
    %1221 = vmatprep.subr.bf16.mxu0 0
    %1222 = vmatpush1.bf16.msra.mxu0 %v823
    %1223 = vmatprep.subr.bf16.mxu0 0
    %1224 = vmatpush1.bf16.msra.mxu0 %v826
    %1225 = vmatprep.subr.bf16.mxu0 0
    %1226 = vmatpush1.bf16.msra.mxu0 %v829
    %1227 = vmatprep.subr.bf16.mxu0 0
    %1228 = vmatpush1.bf16.msra.mxu0 %v832
    %1229 = vmatprep.subr.bf16.mxu0 0
    %1230 = vmatpush1.bf16.msra.mxu0 %v835
    %1231 = vmatprep.subr.bf16.mxu0 0
    %1232 = vmatpush1.bf16.msra.mxu0 %v838
    %1233 = vmatprep.mubr.bf16.mxu0 %v51
    %1234 = vmatmul.mubr.bf16.gmra.mrb[0].mxu0 %v50
    %v1235 = vpop.f32.mrb[0].mxu0
    %v1236 = vadd.f32 %v1195, %v1235
    %v1237 = vpop.f32.mrb[0].mxu0
    %v1238 = vpop.f32.mrb[0].mxu0
    %v1239 = vadd.f32 %v1198, %v1238
    %v1240 = vpop.f32.mrb[0].mxu0
    %1241 = vdwg.mxu0
    %1242 = vmatprep.subr.bf16.mxu0 0
    %1243 = vmatpush1.bf16.msra.mxu0 %v841
    %1244 = vmatprep.subr.bf16.mxu0 0
    %1245 = vmatpush1.bf16.msra.mxu0 %v844
    %1246 = vmatprep.subr.bf16.mxu0 0
    %1247 = vmatpush1.bf16.msra.mxu0 %v847
    %1248 = vmatprep.subr.bf16.mxu0 0
    %1249 = vmatpush1.bf16.msra.mxu0 %v850
    %1250 = vmatprep.subr.bf16.mxu0 0
    %1251 = vmatpush1.bf16.msra.mxu0 %v853
    %1252 = vmatprep.subr.bf16.mxu0 0
    %1253 = vmatpush1.bf16.msra.mxu0 %v856
    %1254 = vmatprep.subr.bf16.mxu0 0
    %1255 = vmatpush1.bf16.msra.mxu0 %v859
    %1256 = vmatprep.subr.bf16.mxu0 0
    %1257 = vmatpush1.bf16.msra.mxu0 %v862
    %1258 = vmatprep.subr.bf16.mxu0 0
    %1259 = vmatpush1.bf16.msra.mxu0 %v865
    %1260 = vmatprep.subr.bf16.mxu0 0
    %1261 = vmatpush1.bf16.msra.mxu0 %v868
    %1262 = vmatprep.subr.bf16.mxu0 0
    %1263 = vmatpush1.bf16.msra.mxu0 %v871
    %1264 = vmatprep.subr.bf16.mxu0 0
    %1265 = vmatpush1.bf16.msra.mxu0 %v874
    %1266 = vmatprep.subr.bf16.mxu0 0
    %1267 = vmatpush1.bf16.msra.mxu0 %v877
    %1268 = vmatprep.subr.bf16.mxu0 0
    %1269 = vmatpush1.bf16.msra.mxu0 %v880
    %1270 = vmatprep.subr.bf16.mxu0 0
    %1271 = vmatpush1.bf16.msra.mxu0 %v883
    %1272 = vmatprep.subr.bf16.mxu0 0
    %1273 = vmatpush1.bf16.msra.mxu0 %v886
    %1274 = vmatprep.mubr.bf16.mxu0 %v53
    %1275 = vmatmul.mubr.bf16.gmra.mrb[0].mxu0 %v52
    %v1276 = vpop.f32.mrb[0].mxu0
    %v1277 = vadd.f32 %v1236, %v1276
    %v1278 = vpop.f32.mrb[0].mxu0
    %v1279 = vpop.f32.mrb[0].mxu0
    %v1280 = vadd.f32 %v1239, %v1279
    %v1281 = vpop.f32.mrb[0].mxu0
    %1282 = vdwg.mxu0
    %v1283 = vmax.f32 %v1152, 0.0
    %v1284 = vmax.f32 %v1154, 0.0
    %v1285 = vmax.f32 %v1277, 0.0
    %v1286 = vmax.f32 %v1156, 0.0
    %v1287 = vmax.f32 %v1158, 0.0
    %v1288 = vmax.f32 %v1280, 0.0
    %v1289 = vpack.c.bf16 %v1286, %v1283
    %v1290 = vpack.c.bf16 %v1287, %v1284
    %v1291 = vpack.c.bf16 %v1288, %v1285
    %v1292 = vld [vmem:[%s2] sm:$0xff]
    %v1293 = vld [vmem:[%s2 + $0x8] sm:$0xff]
    %v1294 = vld [vmem:[%s2 + $0x10] sm:$0xff]
    %v1295 = vld [vmem:[%s2 + $0x18] sm:$0xff]
    %v1296 = vld [vmem:[%s2 + $0x20] sm:$0xff]
    %v1297 = vld [vmem:[%s2 + $0x28] sm:$0xff]
    %v1298 = vld [vmem:[%s2 + $0x30] sm:$0xff]
    %v1299 = vld [vmem:[%s2 + $0x38] sm:$0xff]
    %v1300 = vld [vmem:[%s2 + $0x40] sm:$0xff]
    %v1301 = vld [vmem:[%s2 + $0x48] sm:$0xff]
    %v1302 = vld [vmem:[%s2 + $0x50] sm:$0xff]
    %v1303 = vld [vmem:[%s2 + $0x58] sm:$0xff]
    %v1304 = vld [vmem:[%s2 + $0x60] sm:$0xff]
    %v1305 = vld [vmem:[%s2 + $0x68] sm:$0xff]
    %v1306 = vld [vmem:[%s2 + $0x70] sm:$0xff]
    %v1307 = vld [vmem:[%s2 + $0x78] sm:$0xff]
    %v1308 = vld [vmem:[%s2 + $0x80] sm:$0xff]
    %v1309 = vld [vmem:[%s2 + $0x88] sm:$0xff]
    %v1310 = vld [vmem:[%s2 + $0x90] sm:$0xff]
    %v1311 = vld [vmem:[%s2 + $0x98] sm:$0xff]
    %v1312 = vld [vmem:[%s2 + $0xa0] sm:$0xff]
    %v1313 = vld [vmem:[%s2 + $0xa8] sm:$0xff]
    %v1314 = vld [vmem:[%s2 + $0xb0] sm:$0xff]
    %v1315 = vld [vmem:[%s2 + $0xb8] sm:$0xff]
    %v1316 = vld [vmem:[%s2 + $0xc0] sm:$0xff]
    %v1317 = vld [vmem:[%s2 + $0xc8] sm:$0xff]
    %v1318 = vld [vmem:[%s2 + $0xd0] sm:$0xff]
    %v1319 = vld [vmem:[%s2 + $0xd8] sm:$0xff]
    %v1320 = vld [vmem:[%s2 + $0xe0] sm:$0xff]
    %v1321 = vld [vmem:[%s2 + $0xe8] sm:$0xff]
    %v1322 = vld [vmem:[%s2 + $0xf0] sm:$0xff]
    %v1323 = vld [vmem:[%s2 + $0xf8] sm:$0xff]
    %v1324 = vld [vmem:[%s2 + $0x100] sm:$0xff]
    %v1325 = vld [vmem:[%s2 + $0x108] sm:$0xff]
    %v1326 = vld [vmem:[%s2 + $0x110] sm:$0xff]
    %v1327 = vld [vmem:[%s2 + $0x118] sm:$0xff]
    %v1328 = vld [vmem:[%s2 + $0x120] sm:$0xff]
    %v1329 = vld [vmem:[%s2 + $0x128] sm:$0xff]
    %v1330 = vld [vmem:[%s2 + $0x130] sm:$0xff]
    %v1331 = vld [vmem:[%s2 + $0x138] sm:$0xff]
    %v1332 = vld [vmem:[%s2 + $0x140] sm:$0xff]
    %v1333 = vld [vmem:[%s2 + $0x148] sm:$0xff]
    %v1334 = vld [vmem:[%s2 + $0x150] sm:$0xff]
    %v1335 = vld [vmem:[%s2 + $0x158] sm:$0xff]
    %v1336 = vld [vmem:[%s2 + $0x160] sm:$0xff]
    %v1337 = vld [vmem:[%s2 + $0x168] sm:$0xff]
    %v1338 = vld [vmem:[%s2 + $0x170] sm:$0xff]
    %v1339 = vld [vmem:[%s2 + $0x178] sm:$0xff]
    %s1340 = scalar_lea.vmem %s4, 1
    %v1341 = vld [vmem:[%s1340] ss:$8 sm:$0x3]
    %v1343 = vlaneseq
    %v1344 = vshrl.u32 %v1343, 7
    %v1345 = vsub.s32 0, %v1344
    %v1346 = vrot.slane %v1341, %v1345
    %v1347 = vlaneseq
    %v1348 = vshrl.u32 %v1347, 7
    %v1349 = vsub.s32 1, %v1348
    %v1350 = vrot.slane %v1341, %v1349
    %v1401 = vunpack.c.l.b16 %v1292
    %v1402 = vunpack.c.h.b16 %v1292
    %v1403 = vunpack.c.l.b16 %v1293
    %v1404 = vunpack.c.h.b16 %v1293
    %v1405 = vunpack.c.l.b16 %v1294
    %v1406 = vunpack.c.h.b16 %v1294
    %v1407 = vunpack.c.l.b16 %v1295
    %v1408 = vunpack.c.h.b16 %v1295
    %v1409 = vunpack.c.l.b16 %v1296
    %v1410 = vunpack.c.h.b16 %v1296
    %v1411 = vunpack.c.l.b16 %v1297
    %v1412 = vunpack.c.h.b16 %v1297
    %v1413 = vunpack.c.l.b16 %v1298
    %v1414 = vunpack.c.h.b16 %v1298
    %v1415 = vunpack.c.l.b16 %v1299
    %v1416 = vunpack.c.h.b16 %v1299
    %v1417 = vunpack.c.l.b16 %v1300
    %v1418 = vunpack.c.h.b16 %v1300
    %v1419 = vunpack.c.l.b16 %v1301
    %v1420 = vunpack.c.h.b16 %v1301
    %v1421 = vunpack.c.l.b16 %v1302
    %v1422 = vunpack.c.h.b16 %v1302
    %v1423 = vunpack.c.l.b16 %v1303
    %v1424 = vunpack.c.h.b16 %v1303
    %v1425 = vunpack.c.l.b16 %v1304
    %v1426 = vunpack.c.h.b16 %v1304
    %v1427 = vunpack.c.l.b16 %v1305
    %v1428 = vunpack.c.h.b16 %v1305
    %v1429 = vunpack.c.l.b16 %v1306
    %v1430 = vunpack.c.h.b16 %v1306
    %v1431 = vunpack.c.l.b16 %v1307
    %v1432 = vunpack.c.h.b16 %v1307
    %v1433 = vunpack.c.l.b16 %v1308
    %v1434 = vunpack.c.h.b16 %v1308
    %v1435 = vunpack.c.l.b16 %v1309
    %v1436 = vunpack.c.h.b16 %v1309
    %v1437 = vunpack.c.l.b16 %v1310
    %v1438 = vunpack.c.h.b16 %v1310
    %v1439 = vunpack.c.l.b16 %v1311
    %v1440 = vunpack.c.h.b16 %v1311
    %v1441 = vunpack.c.l.b16 %v1312
    %v1442 = vunpack.c.h.b16 %v1312
    %v1443 = vunpack.c.l.b16 %v1313
    %v1444 = vunpack.c.h.b16 %v1313
    %v1445 = vunpack.c.l.b16 %v1314
    %v1446 = vunpack.c.h.b16 %v1314
    %v1447 = vunpack.c.l.b16 %v1315
    %v1448 = vunpack.c.h.b16 %v1315
    %v1449 = vunpack.c.l.b16 %v1316
    %v1450 = vunpack.c.h.b16 %v1316
    %v1451 = vunpack.c.l.b16 %v1317
    %v1452 = vunpack.c.h.b16 %v1317
    %v1453 = vunpack.c.l.b16 %v1318
    %v1454 = vunpack.c.h.b16 %v1318
    %v1455 = vunpack.c.l.b16 %v1319
    %v1456 = vunpack.c.h.b16 %v1319
    %v1457 = vunpack.c.l.b16 %v1320
    %v1458 = vunpack.c.h.b16 %v1320
    %v1459 = vunpack.c.l.b16 %v1321
    %v1460 = vunpack.c.h.b16 %v1321
    %v1461 = vunpack.c.l.b16 %v1322
    %v1462 = vunpack.c.h.b16 %v1322
    %v1463 = vunpack.c.l.b16 %v1323
    %v1464 = vunpack.c.h.b16 %v1323
    %v1465 = vunpack.c.l.b16 %v1324
    %v1466 = vunpack.c.h.b16 %v1324
    %v1467 = vunpack.c.l.b16 %v1325
    %v1468 = vunpack.c.h.b16 %v1325
    %v1469 = vunpack.c.l.b16 %v1326
    %v1470 = vunpack.c.h.b16 %v1326
    %v1471 = vunpack.c.l.b16 %v1327
    %v1472 = vunpack.c.h.b16 %v1327
    %v1473 = vunpack.c.l.b16 %v1328
    %v1474 = vunpack.c.h.b16 %v1328
    %v1475 = vunpack.c.l.b16 %v1329
    %v1476 = vunpack.c.h.b16 %v1329
    %v1477 = vunpack.c.l.b16 %v1330
    %v1478 = vunpack.c.h.b16 %v1330
    %v1479 = vunpack.c.l.b16 %v1331
    %v1480 = vunpack.c.h.b16 %v1331
    %v1481 = vunpack.c.l.b16 %v1332
    %v1482 = vunpack.c.h.b16 %v1332
    %v1483 = vunpack.c.l.b16 %v1333
    %v1484 = vunpack.c.h.b16 %v1333
    %v1485 = vunpack.c.l.b16 %v1334
    %v1486 = vunpack.c.h.b16 %v1334
    %v1487 = vunpack.c.l.b16 %v1335
    %v1488 = vunpack.c.h.b16 %v1335
    %v1489 = vunpack.c.l.b16 %v1336
    %v1490 = vunpack.c.h.b16 %v1336
    %v1491 = vunpack.c.l.b16 %v1337
    %v1492 = vunpack.c.h.b16 %v1337
    %v1493 = vunpack.c.l.b16 %v1338
    %v1494 = vunpack.c.h.b16 %v1338
    %v1495 = vunpack.c.l.b16 %v1339
    %v1496 = vunpack.c.h.b16 %v1339
    %v1497 = vpack.c.b16 %v1403, %v1401
    %v1498 = vpack.c.b16 %v1404, %v1402
    %v1499 = vpack.c.b16 %v1407, %v1405
    %v1500 = vpack.c.b16 %v1408, %v1406
    %v1501 = vpack.c.b16 %v1411, %v1409
    %v1502 = vpack.c.b16 %v1412, %v1410
    %v1503 = vpack.c.b16 %v1415, %v1413
    %v1504 = vpack.c.b16 %v1416, %v1414
    %v1505 = vpack.c.b16 %v1419, %v1417
    %v1506 = vpack.c.b16 %v1420, %v1418
    %v1507 = vpack.c.b16 %v1423, %v1421
    %v1508 = vpack.c.b16 %v1424, %v1422
    %v1509 = vpack.c.b16 %v1427, %v1425
    %v1510 = vpack.c.b16 %v1428, %v1426
    %v1511 = vpack.c.b16 %v1431, %v1429
    %v1512 = vpack.c.b16 %v1432, %v1430
    %v1513 = vpack.c.b16 %v1435, %v1433
    %v1514 = vpack.c.b16 %v1436, %v1434
    %v1515 = vpack.c.b16 %v1439, %v1437
    %v1516 = vpack.c.b16 %v1440, %v1438
    %v1517 = vpack.c.b16 %v1443, %v1441
    %v1518 = vpack.c.b16 %v1444, %v1442
    %v1519 = vpack.c.b16 %v1447, %v1445
    %v1520 = vpack.c.b16 %v1448, %v1446
    %v1521 = vpack.c.b16 %v1451, %v1449
    %v1522 = vpack.c.b16 %v1452, %v1450
    %v1523 = vpack.c.b16 %v1455, %v1453
    %v1524 = vpack.c.b16 %v1456, %v1454
    %v1525 = vpack.c.b16 %v1459, %v1457
    %v1526 = vpack.c.b16 %v1460, %v1458
    %v1527 = vpack.c.b16 %v1463, %v1461
    %v1528 = vpack.c.b16 %v1464, %v1462
    %v1529 = vpack.c.b16 %v1467, %v1465
    %v1530 = vpack.c.b16 %v1468, %v1466
    %v1531 = vpack.c.b16 %v1471, %v1469
    %v1532 = vpack.c.b16 %v1472, %v1470
    %v1533 = vpack.c.b16 %v1475, %v1473
    %v1534 = vpack.c.b16 %v1476, %v1474
    %v1535 = vpack.c.b16 %v1479, %v1477
    %v1536 = vpack.c.b16 %v1480, %v1478
    %v1537 = vpack.c.b16 %v1483, %v1481
    %v1538 = vpack.c.b16 %v1484, %v1482
    %v1539 = vpack.c.b16 %v1487, %v1485
    %v1540 = vpack.c.b16 %v1488, %v1486
    %v1541 = vpack.c.b16 %v1491, %v1489
    %v1542 = vpack.c.b16 %v1492, %v1490
    %v1543 = vpack.c.b16 %v1495, %v1493
    %v1544 = vpack.c.b16 %v1496, %v1494
    %1593 = vmatprep.subr.bf16.mxu0 %v1498
    %1594 = vmatpush1.bf16.msra.mxu0 %v1497
    %1595 = vmatprep.subr.bf16.mxu0 %v1500
    %1596 = vmatpush1.bf16.msra.mxu0 %v1499
    %1597 = vmatprep.subr.bf16.mxu0 %v1502
    %1598 = vmatpush1.bf16.msra.mxu0 %v1501
    %1599 = vmatprep.subr.bf16.mxu0 %v1504
    %1600 = vmatpush1.bf16.msra.mxu0 %v1503
    %1601 = vmatprep.subr.bf16.mxu0 %v1506
    %1602 = vmatpush1.bf16.msra.mxu0 %v1505
    %1603 = vmatprep.subr.bf16.mxu0 %v1508
    %1604 = vmatpush1.bf16.msra.mxu0 %v1507
    %1605 = vmatprep.subr.bf16.mxu0 %v1510
    %1606 = vmatpush1.bf16.msra.mxu0 %v1509
    %1607 = vmatprep.subr.bf16.mxu0 %v1512
    %1608 = vmatpush1.bf16.msra.mxu0 %v1511
    %1609 = vmatprep.subr.bf16.mxu0 %v1514
    %1610 = vmatpush1.bf16.msra.mxu0 %v1513
    %1611 = vmatprep.subr.bf16.mxu0 %v1516
    %1612 = vmatpush1.bf16.msra.mxu0 %v1515
    %1613 = vmatprep.subr.bf16.mxu0 %v1518
    %1614 = vmatpush1.bf16.msra.mxu0 %v1517
    %1615 = vmatprep.subr.bf16.mxu0 %v1520
    %1616 = vmatpush1.bf16.msra.mxu0 %v1519
    %1617 = vmatprep.subr.bf16.mxu0 %v1522
    %1618 = vmatpush1.bf16.msra.mxu0 %v1521
    %1619 = vmatprep.subr.bf16.mxu0 %v1524
    %1620 = vmatpush1.bf16.msra.mxu0 %v1523
    %1621 = vmatprep.subr.bf16.mxu0 %v1526
    %1622 = vmatpush1.bf16.msra.mxu0 %v1525
    %1623 = vmatprep.subr.bf16.mxu0 %v1528
    %1624 = vmatpush1.bf16.msra.mxu0 %v1527
    %1625 = vmatprep.mubr.bf16.mxu0 %v1290
    %1626 = vmatmul.mubr.bf16.gmra.mrb[0].mxu0 %v1289
    %v1627 = vpop.f32.mrb[0].mxu0
    %v1628 = vadd.f32 %v1346, %v1627
    %v1629 = vpop.f32.mrb[0].mxu0
    %v1630 = vadd.f32 %v1350, %v1629
    %v1631 = vpop.f32.mrb[0].mxu0
    %v1632 = vadd.f32 %v1346, %v1631
    %v1633 = vpop.f32.mrb[0].mxu0
    %v1634 = vadd.f32 %v1350, %v1633
    %1635 = vdwg.mxu0
    %1636 = vmatprep.subr.bf16.mxu0 %v1530
    %1637 = vmatpush1.bf16.msra.mxu0 %v1529
    %1638 = vmatprep.subr.bf16.mxu0 %v1532
    %1639 = vmatpush1.bf16.msra.mxu0 %v1531
    %1640 = vmatprep.subr.bf16.mxu0 %v1534
    %1641 = vmatpush1.bf16.msra.mxu0 %v1533
    %1642 = vmatprep.subr.bf16.mxu0 %v1536
    %1643 = vmatpush1.bf16.msra.mxu0 %v1535
    %1644 = vmatprep.subr.bf16.mxu0 %v1538
    %1645 = vmatpush1.bf16.msra.mxu0 %v1537
    %1646 = vmatprep.subr.bf16.mxu0 %v1540
    %1647 = vmatpush1.bf16.msra.mxu0 %v1539
    %1648 = vmatprep.subr.bf16.mxu0 %v1542
    %1649 = vmatpush1.bf16.msra.mxu0 %v1541
    %1650 = vmatprep.subr.bf16.mxu0 %v1544
    %1651 = vmatpush1.bf16.msra.mxu0 %v1543
    %1652 = vmatprep.subr.bf16.mxu0 0
    %1653 = vmatpush1.bf16.msra.mxu0 0
    %1654 = vmatprep.subr.bf16.mxu0 0
    %1655 = vmatpush1.bf16.msra.mxu0 0
    %1656 = vmatprep.subr.bf16.mxu0 0
    %1657 = vmatpush1.bf16.msra.mxu0 0
    %1658 = vmatprep.subr.bf16.mxu0 0
    %1659 = vmatpush1.bf16.msra.mxu0 0
    %1660 = vmatprep.subr.bf16.mxu0 0
    %1661 = vmatpush1.bf16.msra.mxu0 0
    %1662 = vmatprep.subr.bf16.mxu0 0
    %1663 = vmatpush1.bf16.msra.mxu0 0
    %1664 = vmatprep.subr.bf16.mxu0 0
    %1665 = vmatpush1.bf16.msra.mxu0 0
    %1666 = vmatprep.subr.bf16.mxu0 0
    %1667 = vmatpush1.bf16.msra.mxu0 0
    %1668 = vmatprep.mubr.bf16.mxu0 0
    %1669 = vmatmul.mubr.bf16.gmra.mrb[0].mxu0 %v1291
    %v1670 = vpop.f32.mrb[0].mxu0
    %v1671 = vadd.f32 %v1628, %v1670
    %v1672 = vpop.f32.mrb[0].mxu0
    %v1673 = vadd.f32 %v1630, %v1672
    %v1674 = vpop.f32.mrb[0].mxu0
    %v1675 = vadd.f32 %v1632, %v1674
    %v1676 = vpop.f32.mrb[0].mxu0
    %v1677 = vadd.f32 %v1634, %v1676
    %1678 = vdwg.mxu0
    %v1679 = vmax.f32 %v1671, 0.0
    %v1680 = vmax.f32 %v1673, 0.0
    %v1681 = vmax.f32 %v1675, 0.0
    %v1682 = vmax.f32 %v1677, 0.0
    %v1683 = vpack.c.bf16 %v1681, %v1679
    %v1684 = vpack.c.bf16 %v1682, %v1680
    %v1685 = vld [vmem:[%s3] sm:$0xf]
    %v1686 = vld [vmem:[%s3 + $0x4] sm:$0xf]
    %v1687 = vld [vmem:[%s3 + $0x8] sm:$0xf]
    %v1688 = vld [vmem:[%s3 + $0xc] sm:$0xf]
    %v1689 = vld [vmem:[%s3 + $0x10] sm:$0xf]
    %v1690 = vld [vmem:[%s3 + $0x14] sm:$0xf]
    %v1691 = vld [vmem:[%s3 + $0x18] sm:$0xf]
    %v1692 = vld [vmem:[%s3 + $0x1c] sm:$0xf]
    %v1693 = vld [vmem:[%s3 + $0x20] sm:$0xf]
    %v1694 = vld [vmem:[%s3 + $0x24] sm:$0xf]
    %v1695 = vld [vmem:[%s3 + $0x28] sm:$0xf]
    %v1696 = vld [vmem:[%s3 + $0x2c] sm:$0xf]
    %v1697 = vld [vmem:[%s3 + $0x30] sm:$0xf]
    %v1698 = vld [vmem:[%s3 + $0x34] sm:$0xf]
    %v1699 = vld [vmem:[%s3 + $0x38] sm:$0xf]
    %v1700 = vld [vmem:[%s3 + $0x3c] sm:$0xf]
    %v1701 = vld [vmem:[%s3 + $0x40] sm:$0xf]
    %v1702 = vld [vmem:[%s3 + $0x44] sm:$0xf]
    %v1703 = vld [vmem:[%s3 + $0x48] sm:$0xf]
    %v1704 = vld [vmem:[%s3 + $0x4c] sm:$0xf]
    %v1705 = vld [vmem:[%s3 + $0x50] sm:$0xf]
    %v1706 = vld [vmem:[%s3 + $0x54] sm:$0xf]
    %v1707 = vld [vmem:[%s3 + $0x58] sm:$0xf]
    %v1708 = vld [vmem:[%s3 + $0x5c] sm:$0xf]
    %v1709 = vld [vmem:[%s4 + $0x2] ss:$0 sm:$0xff]
    %v1734 = vunpack.c.l.b16 %v1685
    %v1735 = vunpack.c.l.b16 %v1686
    %v1736 = vunpack.c.l.b16 %v1687
    %v1737 = vunpack.c.l.b16 %v1688
    %v1738 = vunpack.c.l.b16 %v1689
    %v1739 = vunpack.c.l.b16 %v1690
    %v1740 = vunpack.c.l.b16 %v1691
    %v1741 = vunpack.c.l.b16 %v1692
    %v1742 = vunpack.c.l.b16 %v1693
    %v1743 = vunpack.c.l.b16 %v1694
    %v1744 = vunpack.c.l.b16 %v1695
    %v1745 = vunpack.c.l.b16 %v1696
    %v1746 = vunpack.c.l.b16 %v1697
    %v1747 = vunpack.c.l.b16 %v1698
    %v1748 = vunpack.c.l.b16 %v1699
    %v1749 = vunpack.c.l.b16 %v1700
    %v1750 = vunpack.c.l.b16 %v1701
    %v1751 = vunpack.c.l.b16 %v1702
    %v1752 = vunpack.c.l.b16 %v1703
    %v1753 = vunpack.c.l.b16 %v1704
    %v1754 = vunpack.c.l.b16 %v1705
    %v1755 = vunpack.c.l.b16 %v1706
    %v1756 = vunpack.c.l.b16 %v1707
    %v1757 = vunpack.c.l.b16 %v1708
    %v1758 = vpack.c.b16 %v1735, %v1734
    %v1759 = vpack.c.b16 %v1737, %v1736
    %v1760 = vpack.c.b16 %v1739, %v1738
    %v1761 = vpack.c.b16 %v1741, %v1740
    %v1762 = vpack.c.b16 %v1743, %v1742
    %v1763 = vpack.c.b16 %v1745, %v1744
    %v1764 = vpack.c.b16 %v1747, %v1746
    %v1765 = vpack.c.b16 %v1749, %v1748
    %v1766 = vpack.c.b16 %v1751, %v1750
    %v1767 = vpack.c.b16 %v1753, %v1752
    %v1768 = vpack.c.b16 %v1755, %v1754
    %v1769 = vpack.c.b16 %v1757, %v1756
    %vm1782 = vcmask 523264
    %v1784 = vsel %vm1782, %v1684, 0
    %1786 = vmatprep.subr.bf16.mxu0 0
    %1787 = vmatpush1.bf16.msra.mxu0 %v1758
    %1788 = vmatprep.subr.bf16.mxu0 0
    %1789 = vmatpush1.bf16.msra.mxu0 %v1759
    %1790 = vmatprep.subr.bf16.mxu0 0
    %1791 = vmatpush1.bf16.msra.mxu0 %v1760
    %1792 = vmatprep.subr.bf16.mxu0 0
    %1793 = vmatpush1.bf16.msra.mxu0 %v1761
    %1794 = vmatprep.subr.bf16.mxu0 0
    %1795 = vmatpush1.bf16.msra.mxu0 %v1762
    %1796 = vmatprep.subr.bf16.mxu0 0
    %1797 = vmatpush1.bf16.msra.mxu0 %v1763
    %1798 = vmatprep.subr.bf16.mxu0 0
    %1799 = vmatpush1.bf16.msra.mxu0 %v1764
    %1800 = vmatprep.subr.bf16.mxu0 0
    %1801 = vmatpush1.bf16.msra.mxu0 %v1765
    %1802 = vmatprep.subr.bf16.mxu0 0
    %1803 = vmatpush1.bf16.msra.mxu0 %v1766
    %1804 = vmatprep.subr.bf16.mxu0 0
    %1805 = vmatpush1.bf16.msra.mxu0 %v1767
    %1806 = vmatprep.subr.bf16.mxu0 0
    %1807 = vmatpush1.bf16.msra.mxu0 %v1768
    %1808 = vmatprep.subr.bf16.mxu0 0
    %1809 = vmatpush1.bf16.msra.mxu0 %v1769
    %1810 = vmatprep.subr.bf16.mxu0 0
    %1811 = vmatpush1.bf16.msra.mxu0 0
    %1812 = vmatprep.subr.bf16.mxu0 0
    %1813 = vmatpush1.bf16.msra.mxu0 0
    %1814 = vmatprep.subr.bf16.mxu0 0
    %1815 = vmatpush1.bf16.msra.mxu0 0
    %1816 = vmatprep.subr.bf16.mxu0 0
    %1817 = vmatpush1.bf16.msra.mxu0 0
    %1818 = vmatprep.mubr.bf16.mxu0 %v1784
    %1819 = vmatmul.mubr.bf16.gmra.mrb[0].mxu0 %v1683
    %v1820 = vpop.f32.mrb[0].mxu0
    %v1821 = vadd.f32 %v1709, %v1820
    %v1822 = vpop.f32.mrb[0].mxu0
    %v1823 = vpop.f32.mrb[0].mxu0
    %v1824 = vadd.f32 %v1709, %v1823
    %v1825 = vpop.f32.mrb[0].mxu0
    %1826 = vdwg.mxu0
    %v1827 = vmax.f32 %v1821, 0.0
    %v1828 = vmax.f32 %v1824, 0.0
    %v1829 = vpack.c.bf16 %v1828, %v1827
    %v1830 = vld [vmem:[%s3 + $0x60] sm:$0xf]
    %v1831 = vld [vmem:[%s3 + $0x64] sm:$0xf]
    %v1832 = vld [vmem:[%s3 + $0x68] sm:$0xf]
    %v1833 = vld [vmem:[%s3 + $0x6c] sm:$0xf]
    %v1834 = vld [vmem:[%s3 + $0x70] sm:$0xf]
    %v1835 = vld [vmem:[%s3 + $0x74] sm:$0xf]
    %v1836 = vld [vmem:[%s3 + $0x78] sm:$0xf]
    %v1837 = vld [vmem:[%s3 + $0x7c] sm:$0xf]
    %v1838 = vld [vmem:[%s3 + $0x80] sm:$0xf]
    %v1839 = vld [vmem:[%s3 + $0x84] sm:$0xf]
    %v1840 = vld [vmem:[%s3 + $0x88] sm:$0xf]
    %v1841 = vld [vmem:[%s3 + $0x8c] sm:$0xf]
    %v1842 = vld [vmem:[%s3 + $0x90] sm:$0xf]
    %v1843 = vld [vmem:[%s3 + $0x94] sm:$0xf]
    %v1844 = vld [vmem:[%s3 + $0x98] sm:$0xf]
    %v1845 = vld [vmem:[%s3 + $0x9c] sm:$0xf]
    %v1846 = vld [vmem:[%s4 + $0x3] ss:$0 sm:$0xff]
    %v1863 = vunpack.c.l.b16 %v1830
    %v1864 = vunpack.c.l.b16 %v1831
    %v1865 = vunpack.c.l.b16 %v1832
    %v1866 = vunpack.c.l.b16 %v1833
    %v1867 = vunpack.c.l.b16 %v1834
    %v1868 = vunpack.c.l.b16 %v1835
    %v1869 = vunpack.c.l.b16 %v1836
    %v1870 = vunpack.c.l.b16 %v1837
    %v1871 = vunpack.c.l.b16 %v1838
    %v1872 = vunpack.c.l.b16 %v1839
    %v1873 = vunpack.c.l.b16 %v1840
    %v1874 = vunpack.c.l.b16 %v1841
    %v1875 = vunpack.c.l.b16 %v1842
    %v1876 = vunpack.c.l.b16 %v1843
    %v1877 = vunpack.c.l.b16 %v1844
    %v1878 = vunpack.c.l.b16 %v1845
    %v1879 = vpack.c.b16 %v1864, %v1863
    %v1880 = vpack.c.b16 %v1866, %v1865
    %v1881 = vpack.c.b16 %v1868, %v1867
    %v1882 = vpack.c.b16 %v1870, %v1869
    %v1883 = vpack.c.b16 %v1872, %v1871
    %v1884 = vpack.c.b16 %v1874, %v1873
    %v1885 = vpack.c.b16 %v1876, %v1875
    %v1886 = vpack.c.b16 %v1878, %v1877
    %1895 = vmatprep.subr.bf16.mxu0 0
    %1896 = vmatpush1.bf16.msra.mxu0 %v1879
    %1897 = vmatprep.subr.bf16.mxu0 0
    %1898 = vmatpush1.bf16.msra.mxu0 %v1880
    %1899 = vmatprep.subr.bf16.mxu0 0
    %1900 = vmatpush1.bf16.msra.mxu0 %v1881
    %1901 = vmatprep.subr.bf16.mxu0 0
    %1902 = vmatpush1.bf16.msra.mxu0 %v1882
    %1903 = vmatprep.subr.bf16.mxu0 0
    %1904 = vmatpush1.bf16.msra.mxu0 %v1883
    %1905 = vmatprep.subr.bf16.mxu0 0
    %1906 = vmatpush1.bf16.msra.mxu0 %v1884
    %1907 = vmatprep.subr.bf16.mxu0 0
    %1908 = vmatpush1.bf16.msra.mxu0 %v1885
    %1909 = vmatprep.subr.bf16.mxu0 0
    %1910 = vmatpush1.bf16.msra.mxu0 %v1886
    %1911 = vmatprep.subr.bf16.mxu0 0
    %1912 = vmatpush1.bf16.msra.mxu0 0
    %1913 = vmatprep.subr.bf16.mxu0 0
    %1914 = vmatpush1.bf16.msra.mxu0 0
    %1915 = vmatprep.subr.bf16.mxu0 0
    %1916 = vmatpush1.bf16.msra.mxu0 0
    %1917 = vmatprep.subr.bf16.mxu0 0
    %1918 = vmatpush1.bf16.msra.mxu0 0
    %1919 = vmatprep.subr.bf16.mxu0 0
    %1920 = vmatpush1.bf16.msra.mxu0 0
    %1921 = vmatprep.subr.bf16.mxu0 0
    %1922 = vmatpush1.bf16.msra.mxu0 0
    %1923 = vmatprep.subr.bf16.mxu0 0
    %1924 = vmatpush1.bf16.msra.mxu0 0
    %1925 = vmatprep.subr.bf16.mxu0 0
    %1926 = vmatpush1.bf16.msra.mxu0 0
    %1927 = vmatprep.mubr.bf16.mxu0 0
    %1928 = vmatmul.mubr.bf16.gmra.mrb[0].mxu0 %v1829
    %v1929 = vpop.f32.mrb[0].mxu0
    %v1930 = vadd.f32 %v1846, %v1929
    %v1931 = vpop.f32.mrb[0].mxu0
    %v1932 = vpop.f32.mrb[0].mxu0
    %v1933 = vadd.f32 %v1846, %v1932
    %v1934 = vpop.f32.mrb[0].mxu0
    %1935 = vdwg.mxu0
    %v1936 = vmax.f32 %v1930, 0.0
    %v1937 = vmax.f32 %v1933, 0.0
    %v1938 = vpack.c.bf16 %v1937, %v1936
    %v1940 = vunpack.c.l.b16 %v1938
    %v1941 = vunpack.c.h.b16 %v1938
    %v1942 = vld [vmem:[%s3 + $0xa0] sm:$0xf]
    %v1943 = vld [vmem:[%s3 + $0xa4] sm:$0xf]
    %v1944 = vld [vmem:[%s3 + $0xa8] sm:$0xf]
    %v1945 = vld [vmem:[%s3 + $0xac] sm:$0xf]
    %v1946 = vld [vmem:[%s3 + $0xb0] sm:$0xf]
    %v1947 = vld [vmem:[%s3 + $0xb4] sm:$0xf]
    %v1948 = vld [vmem:[%s3 + $0xb8] sm:$0xf]
    %v1949 = vld [vmem:[%s3 + $0xbc] sm:$0xf]
    %v1950 = vld [vmem:[%s3 + $0xc0] sm:$0xf]
    %v1951 = vld [vmem:[%s3 + $0xc4] sm:$0xf]
    %v1952 = vld [vmem:[%s3 + $0xc8] sm:$0xf]
    %v1953 = vld [vmem:[%s3 + $0xcc] sm:$0xf]
    %v1954 = vld [vmem:[%s3 + $0xd0] sm:$0xf]
    %v1955 = vld [vmem:[%s3 + $0xd4] sm:$0xf]
    %v1956 = vld [vmem:[%s3 + $0xd8] sm:$0xf]
    %v1957 = vld [vmem:[%s3 + $0xdc] sm:$0xf]
    %v1958 = vpack.c.b16 %v1940, %v1940
    %v1959 = vpack.c.b16 %v1941, %v1941
    %v1960 = vunpack.c.l.b16 %v1958
    %v1961 = vunpack.c.l.b16 %v1959
    %v1962 = vrot.slane %v1960, 1
    %vm1963 = vcmask 1041409
    %v1964 = vsel %vm1963, %v1961, %v1962
    %v1965 = vpack.c.b16 %v1964, %v1964
    %v1974 = vunpack.c.l.b16 %v1950
    %v1975 = vunpack.c.l.b16 %v1951
    %v1976 = vunpack.c.l.b16 %v1952
    %v1977 = vunpack.c.l.b16 %v1953
    %v1978 = vunpack.c.l.b16 %v1954
    %v1979 = vunpack.c.l.b16 %v1955
    %v1980 = vunpack.c.l.b16 %v1956
    %v1981 = vunpack.c.l.b16 %v1957
    %v1982 = vpack.c.b16 %v1975, %v1974
    %v1983 = vpack.c.b16 %v1977, %v1976
    %v1984 = vpack.c.b16 %v1979, %v1978
    %v1985 = vpack.c.b16 %v1981, %v1980
    %v1991 = vsel %vm1782, %v1965, 0
    %1993 = vmatprep.subr.bf16.mxu0 0
    %1994 = vmatpush1.bf16.msra.mxu0 %v1982
    %1995 = vmatprep.subr.bf16.mxu0 0
    %1996 = vmatpush1.bf16.msra.mxu0 %v1983
    %1997 = vmatprep.subr.bf16.mxu0 0
    %1998 = vmatpush1.bf16.msra.mxu0 %v1984
    %1999 = vmatprep.subr.bf16.mxu0 0
    %2000 = vmatpush1.bf16.msra.mxu0 %v1985
    %2001 = vmatprep.subr.bf16.mxu0 0
    %2002 = vmatpush1.bf16.msra.mxu0 0
    %2003 = vmatprep.subr.bf16.mxu0 0
    %2004 = vmatpush1.bf16.msra.mxu0 0
    %2005 = vmatprep.subr.bf16.mxu0 0
    %2006 = vmatpush1.bf16.msra.mxu0 0
    %2007 = vmatprep.subr.bf16.mxu0 0
    %2008 = vmatpush1.bf16.msra.mxu0 0
    %2009 = vmatprep.subr.bf16.mxu0 0
    %2010 = vmatpush1.bf16.msra.mxu0 0
    %2011 = vmatprep.subr.bf16.mxu0 0
    %2012 = vmatpush1.bf16.msra.mxu0 0
    %2013 = vmatprep.subr.bf16.mxu0 0
    %2014 = vmatpush1.bf16.msra.mxu0 0
    %2015 = vmatprep.subr.bf16.mxu0 0
    %2016 = vmatpush1.bf16.msra.mxu0 0
    %2017 = vmatprep.subr.bf16.mxu0 0
    %2018 = vmatpush1.bf16.msra.mxu0 0
    %2019 = vmatprep.subr.bf16.mxu0 0
    %2020 = vmatpush1.bf16.msra.mxu0 0
    %2021 = vmatprep.subr.bf16.mxu0 0
    %2022 = vmatpush1.bf16.msra.mxu0 0
    %2023 = vmatprep.subr.bf16.mxu0 0
    %2024 = vmatpush1.bf16.msra.mxu0 0
    %2025 = vmatprep.mubr.bf16.mxu0 0
    %2026 = vmatmul.mubr.bf16.gmra.mrb[0].mxu0 %v1991
    %v2027 = vpop.f32.mrb[0].mxu0
    %v2028 = vadd.f32 0.0, %v2027
    %v2029 = vpop.f32.mrb[0].mxu0
    %v2030 = vpop.f32.mrb[0].mxu0
    %v2031 = vpop.f32.mrb[0].mxu0
    %2032 = vdwg.mxu0
    %v2033 = vld [vmem:[%s3 + $0xe0] sm:$0xf]
    %v2034 = vld [vmem:[%s3 + $0xe4] sm:$0xf]
    %v2035 = vld [vmem:[%s3 + $0xe8] sm:$0xf]
    %v2036 = vld [vmem:[%s3 + $0xec] sm:$0xf]
    %v2037 = vld [vmem:[%s3 + $0xf0] sm:$0xf]
    %v2038 = vld [vmem:[%s3 + $0xf4] sm:$0xf]
    %v2039 = vld [vmem:[%s3 + $0xf8] sm:$0xf]
    %v2040 = vld [vmem:[%s3 + $0xfc] sm:$0xf]
    %v2041 = vld [vmem:[%s3 + $0x100] sm:$0xf]
    %v2042 = vld [vmem:[%s3 + $0x104] sm:$0xf]
    %v2043 = vld [vmem:[%s3 + $0x108] sm:$0xf]
    %v2044 = vld [vmem:[%s3 + $0x10c] sm:$0xf]
    %v2045 = vld [vmem:[%s3 + $0x110] sm:$0xf]
    %v2046 = vld [vmem:[%s3 + $0x114] sm:$0xf]
    %v2047 = vld [vmem:[%s3 + $0x118] sm:$0xf]
    %v2048 = vld [vmem:[%s3 + $0x11c] sm:$0xf]
    %v2049 = vrot.slane %v1960, 3
    %v2050 = vrot.slane %v1961, 2
    %v2051 = vsel %vm1963, %v2050, %v2049
    %v2052 = vpack.c.b16 %v2051, %v2051
    %v2061 = vunpack.c.l.b16 %v2041
    %v2062 = vunpack.c.l.b16 %v2042
    %v2063 = vunpack.c.l.b16 %v2043
    %v2064 = vunpack.c.l.b16 %v2044
    %v2065 = vunpack.c.l.b16 %v2045
    %v2066 = vunpack.c.l.b16 %v2046
    %v2067 = vunpack.c.l.b16 %v2047
    %v2068 = vunpack.c.l.b16 %v2048
    %v2069 = vpack.c.b16 %v2062, %v2061
    %v2070 = vpack.c.b16 %v2064, %v2063
    %v2071 = vpack.c.b16 %v2066, %v2065
    %v2072 = vpack.c.b16 %v2068, %v2067
    %v2078 = vsel %vm1782, %v2052, 0
    %2080 = vmatprep.subr.bf16.mxu0 0
    %2081 = vmatpush1.bf16.msra.mxu0 %v2069
    %2082 = vmatprep.subr.bf16.mxu0 0
    %2083 = vmatpush1.bf16.msra.mxu0 %v2070
    %2084 = vmatprep.subr.bf16.mxu0 0
    %2085 = vmatpush1.bf16.msra.mxu0 %v2071
    %2086 = vmatprep.subr.bf16.mxu0 0
    %2087 = vmatpush1.bf16.msra.mxu0 %v2072
    %2088 = vmatprep.subr.bf16.mxu0 0
    %2089 = vmatpush1.bf16.msra.mxu0 0
    %2090 = vmatprep.subr.bf16.mxu0 0
    %2091 = vmatpush1.bf16.msra.mxu0 0
    %2092 = vmatprep.subr.bf16.mxu0 0
    %2093 = vmatpush1.bf16.msra.mxu0 0
    %2094 = vmatprep.subr.bf16.mxu0 0
    %2095 = vmatpush1.bf16.msra.mxu0 0
    %2096 = vmatprep.subr.bf16.mxu0 0
    %2097 = vmatpush1.bf16.msra.mxu0 0
    %2098 = vmatprep.subr.bf16.mxu0 0
    %2099 = vmatpush1.bf16.msra.mxu0 0
    %2100 = vmatprep.subr.bf16.mxu0 0
    %2101 = vmatpush1.bf16.msra.mxu0 0
    %2102 = vmatprep.subr.bf16.mxu0 0
    %2103 = vmatpush1.bf16.msra.mxu0 0
    %2104 = vmatprep.subr.bf16.mxu0 0
    %2105 = vmatpush1.bf16.msra.mxu0 0
    %2106 = vmatprep.subr.bf16.mxu0 0
    %2107 = vmatpush1.bf16.msra.mxu0 0
    %2108 = vmatprep.subr.bf16.mxu0 0
    %2109 = vmatpush1.bf16.msra.mxu0 0
    %2110 = vmatprep.subr.bf16.mxu0 0
    %2111 = vmatpush1.bf16.msra.mxu0 0
    %2112 = vmatprep.mubr.bf16.mxu0 0
    %2113 = vmatmul.mubr.bf16.gmra.mrb[0].mxu0 %v2078
    %v2114 = vpop.f32.mrb[0].mxu0
    %v2115 = vadd.f32 0.0, %v2114
    %v2116 = vpop.f32.mrb[0].mxu0
    %v2117 = vpop.f32.mrb[0].mxu0
    %v2118 = vpop.f32.mrb[0].mxu0
    %2119 = vdwg.mxu0
    %v2120 = vld [vmem:[%s3 + $0x120] sm:$0xf]
    %v2121 = vld [vmem:[%s3 + $0x124] sm:$0xf]
    %v2122 = vld [vmem:[%s3 + $0x128] sm:$0xf]
    %v2123 = vld [vmem:[%s3 + $0x12c] sm:$0xf]
    %v2124 = vld [vmem:[%s3 + $0x130] sm:$0xf]
    %v2125 = vld [vmem:[%s3 + $0x134] sm:$0xf]
    %v2126 = vld [vmem:[%s3 + $0x138] sm:$0xf]
    %v2127 = vld [vmem:[%s3 + $0x13c] sm:$0xf]
    %v2128 = vld [vmem:[%s3 + $0x140] sm:$0xf]
    %v2129 = vld [vmem:[%s3 + $0x144] sm:$0xf]
    %v2130 = vld [vmem:[%s3 + $0x148] sm:$0xf]
    %v2131 = vld [vmem:[%s3 + $0x14c] sm:$0xf]
    %v2132 = vld [vmem:[%s3 + $0x150] sm:$0xf]
    %v2133 = vld [vmem:[%s3 + $0x154] sm:$0xf]
    %v2134 = vld [vmem:[%s3 + $0x158] sm:$0xf]
    %v2135 = vld [vmem:[%s3 + $0x15c] sm:$0xf]
    %v2136 = vrot.slane %v1960, 5
    %v2137 = vrot.slane %v1961, 4
    %v2138 = vsel %vm1963, %v2137, %v2136
    %v2139 = vpack.c.b16 %v2138, %v2138
    %v2148 = vunpack.c.l.b16 %v2128
    %v2149 = vunpack.c.l.b16 %v2129
    %v2150 = vunpack.c.l.b16 %v2130
    %v2151 = vunpack.c.l.b16 %v2131
    %v2152 = vunpack.c.l.b16 %v2132
    %v2153 = vunpack.c.l.b16 %v2133
    %v2154 = vunpack.c.l.b16 %v2134
    %v2155 = vunpack.c.l.b16 %v2135
    %v2156 = vpack.c.b16 %v2149, %v2148
    %v2157 = vpack.c.b16 %v2151, %v2150
    %v2158 = vpack.c.b16 %v2153, %v2152
    %v2159 = vpack.c.b16 %v2155, %v2154
    %v2165 = vsel %vm1782, %v2139, 0
    %2167 = vmatprep.subr.bf16.mxu0 0
    %2168 = vmatpush1.bf16.msra.mxu0 %v2156
    %2169 = vmatprep.subr.bf16.mxu0 0
    %2170 = vmatpush1.bf16.msra.mxu0 %v2157
    %2171 = vmatprep.subr.bf16.mxu0 0
    %2172 = vmatpush1.bf16.msra.mxu0 %v2158
    %2173 = vmatprep.subr.bf16.mxu0 0
    %2174 = vmatpush1.bf16.msra.mxu0 %v2159
    %2175 = vmatprep.subr.bf16.mxu0 0
    %2176 = vmatpush1.bf16.msra.mxu0 0
    %2177 = vmatprep.subr.bf16.mxu0 0
    %2178 = vmatpush1.bf16.msra.mxu0 0
    %2179 = vmatprep.subr.bf16.mxu0 0
    %2180 = vmatpush1.bf16.msra.mxu0 0
    %2181 = vmatprep.subr.bf16.mxu0 0
    %2182 = vmatpush1.bf16.msra.mxu0 0
    %2183 = vmatprep.subr.bf16.mxu0 0
    %2184 = vmatpush1.bf16.msra.mxu0 0
    %2185 = vmatprep.subr.bf16.mxu0 0
    %2186 = vmatpush1.bf16.msra.mxu0 0
    %2187 = vmatprep.subr.bf16.mxu0 0
    %2188 = vmatpush1.bf16.msra.mxu0 0
    %2189 = vmatprep.subr.bf16.mxu0 0
    %2190 = vmatpush1.bf16.msra.mxu0 0
    %2191 = vmatprep.subr.bf16.mxu0 0
    %2192 = vmatpush1.bf16.msra.mxu0 0
    %2193 = vmatprep.subr.bf16.mxu0 0
    %2194 = vmatpush1.bf16.msra.mxu0 0
    %2195 = vmatprep.subr.bf16.mxu0 0
    %2196 = vmatpush1.bf16.msra.mxu0 0
    %2197 = vmatprep.subr.bf16.mxu0 0
    %2198 = vmatpush1.bf16.msra.mxu0 0
    %2199 = vmatprep.mubr.bf16.mxu0 0
    %2200 = vmatmul.mubr.bf16.gmra.mrb[0].mxu0 %v2165
    %v2201 = vpop.f32.mrb[0].mxu0
    %v2202 = vadd.f32 0.0, %v2201
    %v2203 = vpop.f32.mrb[0].mxu0
    %v2204 = vpop.f32.mrb[0].mxu0
    %v2205 = vpop.f32.mrb[0].mxu0
    %2206 = vdwg.mxu0
    %v2207 = vld [vmem:[%s3 + $0x160] sm:$0xf]
    %v2208 = vld [vmem:[%s3 + $0x164] sm:$0xf]
    %v2209 = vld [vmem:[%s3 + $0x168] sm:$0xf]
    %v2210 = vld [vmem:[%s3 + $0x16c] sm:$0xf]
    %v2211 = vld [vmem:[%s3 + $0x170] sm:$0xf]
    %v2212 = vld [vmem:[%s3 + $0x174] sm:$0xf]
    %v2213 = vld [vmem:[%s3 + $0x178] sm:$0xf]
    %v2214 = vld [vmem:[%s3 + $0x17c] sm:$0xf]
    %v2215 = vld [vmem:[%s3 + $0x180] sm:$0xf]
    %v2216 = vld [vmem:[%s3 + $0x184] sm:$0xf]
    %v2217 = vld [vmem:[%s3 + $0x188] sm:$0xf]
    %v2218 = vld [vmem:[%s3 + $0x18c] sm:$0xf]
    %v2219 = vld [vmem:[%s3 + $0x190] sm:$0xf]
    %v2220 = vld [vmem:[%s3 + $0x194] sm:$0xf]
    %v2221 = vld [vmem:[%s3 + $0x198] sm:$0xf]
    %v2222 = vld [vmem:[%s3 + $0x19c] sm:$0xf]
    %v2223 = vrot.slane %v1960, 7
    %v2224 = vrot.slane %v1961, 6
    %v2225 = vsel %vm1963, %v2224, %v2223
    %v2226 = vpack.c.b16 %v2225, %v2225
    %v2235 = vunpack.c.l.b16 %v2215
    %v2236 = vunpack.c.l.b16 %v2216
    %v2237 = vunpack.c.l.b16 %v2217
    %v2238 = vunpack.c.l.b16 %v2218
    %v2239 = vunpack.c.l.b16 %v2219
    %v2240 = vunpack.c.l.b16 %v2220
    %v2241 = vunpack.c.l.b16 %v2221
    %v2242 = vunpack.c.l.b16 %v2222
    %v2243 = vpack.c.b16 %v2236, %v2235
    %v2244 = vpack.c.b16 %v2238, %v2237
    %v2245 = vpack.c.b16 %v2240, %v2239
    %v2246 = vpack.c.b16 %v2242, %v2241
    %v2252 = vsel %vm1782, %v2226, 0
    %2254 = vmatprep.subr.bf16.mxu0 0
    %2255 = vmatpush1.bf16.msra.mxu0 %v2243
    %2256 = vmatprep.subr.bf16.mxu0 0
    %2257 = vmatpush1.bf16.msra.mxu0 %v2244
    %2258 = vmatprep.subr.bf16.mxu0 0
    %2259 = vmatpush1.bf16.msra.mxu0 %v2245
    %2260 = vmatprep.subr.bf16.mxu0 0
    %2261 = vmatpush1.bf16.msra.mxu0 %v2246
    %2262 = vmatprep.subr.bf16.mxu0 0
    %2263 = vmatpush1.bf16.msra.mxu0 0
    %2264 = vmatprep.subr.bf16.mxu0 0
    %2265 = vmatpush1.bf16.msra.mxu0 0
    %2266 = vmatprep.subr.bf16.mxu0 0
    %2267 = vmatpush1.bf16.msra.mxu0 0
    %2268 = vmatprep.subr.bf16.mxu0 0
    %2269 = vmatpush1.bf16.msra.mxu0 0
    %2270 = vmatprep.subr.bf16.mxu0 0
    %2271 = vmatpush1.bf16.msra.mxu0 0
    %2272 = vmatprep.subr.bf16.mxu0 0
    %2273 = vmatpush1.bf16.msra.mxu0 0
    %2274 = vmatprep.subr.bf16.mxu0 0
    %2275 = vmatpush1.bf16.msra.mxu0 0
    %2276 = vmatprep.subr.bf16.mxu0 0
    %2277 = vmatpush1.bf16.msra.mxu0 0
    %2278 = vmatprep.subr.bf16.mxu0 0
    %2279 = vmatpush1.bf16.msra.mxu0 0
    %2280 = vmatprep.subr.bf16.mxu0 0
    %2281 = vmatpush1.bf16.msra.mxu0 0
    %2282 = vmatprep.subr.bf16.mxu0 0
    %2283 = vmatpush1.bf16.msra.mxu0 0
    %2284 = vmatprep.subr.bf16.mxu0 0
    %2285 = vmatpush1.bf16.msra.mxu0 0
    %2286 = vmatprep.mubr.bf16.mxu0 0
    %2287 = vmatmul.mubr.bf16.gmra.mrb[0].mxu0 %v2252
    %v2288 = vpop.f32.mrb[0].mxu0
    %v2289 = vadd.f32 0.0, %v2288
    %v2290 = vpop.f32.mrb[0].mxu0
    %v2291 = vpop.f32.mrb[0].mxu0
    %v2292 = vpop.f32.mrb[0].mxu0
    %2293 = vdwg.mxu0
    %v2294 = vrot.slane %v1961, 7
    %v2295 = vsel %vm1963, %v2294, %v1960
    %v2296 = vpack.c.b16 %v2295, %v2295
    %v2305 = vunpack.c.l.b16 %v1942
    %v2306 = vunpack.c.l.b16 %v1943
    %v2307 = vunpack.c.l.b16 %v1944
    %v2308 = vunpack.c.l.b16 %v1945
    %v2309 = vunpack.c.l.b16 %v1946
    %v2310 = vunpack.c.l.b16 %v1947
    %v2311 = vunpack.c.l.b16 %v1948
    %v2312 = vunpack.c.l.b16 %v1949
    %v2313 = vpack.c.b16 %v2306, %v2305
    %v2314 = vpack.c.b16 %v2308, %v2307
    %v2315 = vpack.c.b16 %v2310, %v2309
    %v2316 = vpack.c.b16 %v2312, %v2311
    %v2322 = vsel %vm1782, %v2296, 0
    %2324 = vmatprep.subr.bf16.mxu0 0
    %2325 = vmatpush1.bf16.msra.mxu0 %v2313
    %2326 = vmatprep.subr.bf16.mxu0 0
    %2327 = vmatpush1.bf16.msra.mxu0 %v2314
    %2328 = vmatprep.subr.bf16.mxu0 0
    %2329 = vmatpush1.bf16.msra.mxu0 %v2315
    %2330 = vmatprep.subr.bf16.mxu0 0
    %2331 = vmatpush1.bf16.msra.mxu0 %v2316
    %2332 = vmatprep.subr.bf16.mxu0 0
    %2333 = vmatpush1.bf16.msra.mxu0 0
    %2334 = vmatprep.subr.bf16.mxu0 0
    %2335 = vmatpush1.bf16.msra.mxu0 0
    %2336 = vmatprep.subr.bf16.mxu0 0
    %2337 = vmatpush1.bf16.msra.mxu0 0
    %2338 = vmatprep.subr.bf16.mxu0 0
    %2339 = vmatpush1.bf16.msra.mxu0 0
    %2340 = vmatprep.subr.bf16.mxu0 0
    %2341 = vmatpush1.bf16.msra.mxu0 0
    %2342 = vmatprep.subr.bf16.mxu0 0
    %2343 = vmatpush1.bf16.msra.mxu0 0
    %2344 = vmatprep.subr.bf16.mxu0 0
    %2345 = vmatpush1.bf16.msra.mxu0 0
    %2346 = vmatprep.subr.bf16.mxu0 0
    %2347 = vmatpush1.bf16.msra.mxu0 0
    %2348 = vmatprep.subr.bf16.mxu0 0
    %2349 = vmatpush1.bf16.msra.mxu0 0
    %2350 = vmatprep.subr.bf16.mxu0 0
    %2351 = vmatpush1.bf16.msra.mxu0 0
    %2352 = vmatprep.subr.bf16.mxu0 0
    %2353 = vmatpush1.bf16.msra.mxu0 0
    %2354 = vmatprep.subr.bf16.mxu0 0
    %2355 = vmatpush1.bf16.msra.mxu0 0
    %2356 = vmatprep.mubr.bf16.mxu0 0
    %2357 = vmatmul.mubr.bf16.gmra.mrb[0].mxu0 %v2322
    %v2358 = vpop.f32.mrb[0].mxu0
    %v2359 = vadd.f32 %v2028, %v2358
    %v2360 = vpop.f32.mrb[0].mxu0
    %v2361 = vpop.f32.mrb[0].mxu0
    %v2362 = vpop.f32.mrb[0].mxu0
    %2363 = vdwg.mxu0
    %v2364 = vrot.slane %v1960, 2
    %v2365 = vrot.slane %v1961, 1
    %v2366 = vsel %vm1963, %v2365, %v2364
    %v2367 = vpack.c.b16 %v2366, %v2366
    %v2376 = vunpack.c.l.b16 %v2033
    %v2377 = vunpack.c.l.b16 %v2034
    %v2378 = vunpack.c.l.b16 %v2035
    %v2379 = vunpack.c.l.b16 %v2036
    %v2380 = vunpack.c.l.b16 %v2037
    %v2381 = vunpack.c.l.b16 %v2038
    %v2382 = vunpack.c.l.b16 %v2039
    %v2383 = vunpack.c.l.b16 %v2040
    %v2384 = vpack.c.b16 %v2377, %v2376
    %v2385 = vpack.c.b16 %v2379, %v2378
    %v2386 = vpack.c.b16 %v2381, %v2380
    %v2387 = vpack.c.b16 %v2383, %v2382
    %v2393 = vsel %vm1782, %v2367, 0
    %2395 = vmatprep.subr.bf16.mxu0 0
    %2396 = vmatpush1.bf16.msra.mxu0 %v2384
    %2397 = vmatprep.subr.bf16.mxu0 0
    %2398 = vmatpush1.bf16.msra.mxu0 %v2385
    %2399 = vmatprep.subr.bf16.mxu0 0
    %2400 = vmatpush1.bf16.msra.mxu0 %v2386
    %2401 = vmatprep.subr.bf16.mxu0 0
    %2402 = vmatpush1.bf16.msra.mxu0 %v2387
    %2403 = vmatprep.subr.bf16.mxu0 0
    %2404 = vmatpush1.bf16.msra.mxu0 0
    %2405 = vmatprep.subr.bf16.mxu0 0
    %2406 = vmatpush1.bf16.msra.mxu0 0
    %2407 = vmatprep.subr.bf16.mxu0 0
    %2408 = vmatpush1.bf16.msra.mxu0 0
    %2409 = vmatprep.subr.bf16.mxu0 0
    %2410 = vmatpush1.bf16.msra.mxu0 0
    %2411 = vmatprep.subr.bf16.mxu0 0
    %2412 = vmatpush1.bf16.msra.mxu0 0
    %2413 = vmatprep.subr.bf16.mxu0 0
    %2414 = vmatpush1.bf16.msra.mxu0 0
    %2415 = vmatprep.subr.bf16.mxu0 0
    %2416 = vmatpush1.bf16.msra.mxu0 0
    %2417 = vmatprep.subr.bf16.mxu0 0
    %2418 = vmatpush1.bf16.msra.mxu0 0
    %2419 = vmatprep.subr.bf16.mxu0 0
    %2420 = vmatpush1.bf16.msra.mxu0 0
    %2421 = vmatprep.subr.bf16.mxu0 0
    %2422 = vmatpush1.bf16.msra.mxu0 0
    %2423 = vmatprep.subr.bf16.mxu0 0
    %2424 = vmatpush1.bf16.msra.mxu0 0
    %2425 = vmatprep.subr.bf16.mxu0 0
    %2426 = vmatpush1.bf16.msra.mxu0 0
    %2427 = vmatprep.mubr.bf16.mxu0 0
    %2428 = vmatmul.mubr.bf16.gmra.mrb[0].mxu0 %v2393
    %v2429 = vpop.f32.mrb[0].mxu0
    %v2430 = vadd.f32 %v2115, %v2429
    %v2431 = vpop.f32.mrb[0].mxu0
    %v2432 = vpop.f32.mrb[0].mxu0
    %v2433 = vpop.f32.mrb[0].mxu0
    %2434 = vdwg.mxu0
    %v2435 = vrot.slane %v1960, 4
    %v2436 = vrot.slane %v1961, 3
    %v2437 = vsel %vm1963, %v2436, %v2435
    %v2438 = vpack.c.b16 %v2437, %v2437
    %v2447 = vunpack.c.l.b16 %v2120
    %v2448 = vunpack.c.l.b16 %v2121
    %v2449 = vunpack.c.l.b16 %v2122
    %v2450 = vunpack.c.l.b16 %v2123
    %v2451 = vunpack.c.l.b16 %v2124
    %v2452 = vunpack.c.l.b16 %v2125
    %v2453 = vunpack.c.l.b16 %v2126
    %v2454 = vunpack.c.l.b16 %v2127
    %v2455 = vpack.c.b16 %v2448, %v2447
    %v2456 = vpack.c.b16 %v2450, %v2449
    %v2457 = vpack.c.b16 %v2452, %v2451
    %v2458 = vpack.c.b16 %v2454, %v2453
    %v2464 = vsel %vm1782, %v2438, 0
    %2466 = vmatprep.subr.bf16.mxu0 0
    %2467 = vmatpush1.bf16.msra.mxu0 %v2455
    %2468 = vmatprep.subr.bf16.mxu0 0
    %2469 = vmatpush1.bf16.msra.mxu0 %v2456
    %2470 = vmatprep.subr.bf16.mxu0 0
    %2471 = vmatpush1.bf16.msra.mxu0 %v2457
    %2472 = vmatprep.subr.bf16.mxu0 0
    %2473 = vmatpush1.bf16.msra.mxu0 %v2458
    %2474 = vmatprep.subr.bf16.mxu0 0
    %2475 = vmatpush1.bf16.msra.mxu0 0
    %2476 = vmatprep.subr.bf16.mxu0 0
    %2477 = vmatpush1.bf16.msra.mxu0 0
    %2478 = vmatprep.subr.bf16.mxu0 0
    %2479 = vmatpush1.bf16.msra.mxu0 0
    %2480 = vmatprep.subr.bf16.mxu0 0
    %2481 = vmatpush1.bf16.msra.mxu0 0
    %2482 = vmatprep.subr.bf16.mxu0 0
    %2483 = vmatpush1.bf16.msra.mxu0 0
    %2484 = vmatprep.subr.bf16.mxu0 0
    %2485 = vmatpush1.bf16.msra.mxu0 0
    %2486 = vmatprep.subr.bf16.mxu0 0
    %2487 = vmatpush1.bf16.msra.mxu0 0
    %2488 = vmatprep.subr.bf16.mxu0 0
    %2489 = vmatpush1.bf16.msra.mxu0 0
    %2490 = vmatprep.subr.bf16.mxu0 0
    %2491 = vmatpush1.bf16.msra.mxu0 0
    %2492 = vmatprep.subr.bf16.mxu0 0
    %2493 = vmatpush1.bf16.msra.mxu0 0
    %2494 = vmatprep.subr.bf16.mxu0 0
    %2495 = vmatpush1.bf16.msra.mxu0 0
    %2496 = vmatprep.subr.bf16.mxu0 0
    %2497 = vmatpush1.bf16.msra.mxu0 0
    %2498 = vmatprep.mubr.bf16.mxu0 0
    %2499 = vmatmul.mubr.bf16.gmra.mrb[0].mxu0 %v2464
    %v2500 = vpop.f32.mrb[0].mxu0
    %v2501 = vadd.f32 %v2202, %v2500
    %v2502 = vpop.f32.mrb[0].mxu0
    %v2503 = vpop.f32.mrb[0].mxu0
    %v2504 = vpop.f32.mrb[0].mxu0
    %2505 = vdwg.mxu0
    %v2506 = vrot.slane %v1960, 6
    %v2507 = vrot.slane %v1961, 5
    %v2508 = vsel %vm1963, %v2507, %v2506
    %v2509 = vpack.c.b16 %v2508, %v2508
    %v2518 = vunpack.c.l.b16 %v2207
    %v2519 = vunpack.c.l.b16 %v2208
    %v2520 = vunpack.c.l.b16 %v2209
    %v2521 = vunpack.c.l.b16 %v2210
    %v2522 = vunpack.c.l.b16 %v2211
    %v2523 = vunpack.c.l.b16 %v2212
    %v2524 = vunpack.c.l.b16 %v2213
    %v2525 = vunpack.c.l.b16 %v2214
    %v2526 = vpack.c.b16 %v2519, %v2518
    %v2527 = vpack.c.b16 %v2521, %v2520
    %v2528 = vpack.c.b16 %v2523, %v2522
    %v2529 = vpack.c.b16 %v2525, %v2524
    %v2535 = vsel %vm1782, %v2509, 0
    %2537 = vmatprep.subr.bf16.mxu0 0
    %2538 = vmatpush1.bf16.msra.mxu0 %v2526
    %2539 = vmatprep.subr.bf16.mxu0 0
    %2540 = vmatpush1.bf16.msra.mxu0 %v2527
    %2541 = vmatprep.subr.bf16.mxu0 0
    %2542 = vmatpush1.bf16.msra.mxu0 %v2528
    %2543 = vmatprep.subr.bf16.mxu0 0
    %2544 = vmatpush1.bf16.msra.mxu0 %v2529
    %2545 = vmatprep.subr.bf16.mxu0 0
    %2546 = vmatpush1.bf16.msra.mxu0 0
    %2547 = vmatprep.subr.bf16.mxu0 0
    %2548 = vmatpush1.bf16.msra.mxu0 0
    %2549 = vmatprep.subr.bf16.mxu0 0
    %2550 = vmatpush1.bf16.msra.mxu0 0
    %2551 = vmatprep.subr.bf16.mxu0 0
    %2552 = vmatpush1.bf16.msra.mxu0 0
    %2553 = vmatprep.subr.bf16.mxu0 0
    %2554 = vmatpush1.bf16.msra.mxu0 0
    %2555 = vmatprep.subr.bf16.mxu0 0
    %2556 = vmatpush1.bf16.msra.mxu0 0
    %2557 = vmatprep.subr.bf16.mxu0 0
    %2558 = vmatpush1.bf16.msra.mxu0 0
    %2559 = vmatprep.subr.bf16.mxu0 0
    %2560 = vmatpush1.bf16.msra.mxu0 0
    %2561 = vmatprep.subr.bf16.mxu0 0
    %2562 = vmatpush1.bf16.msra.mxu0 0
    %2563 = vmatprep.subr.bf16.mxu0 0
    %2564 = vmatpush1.bf16.msra.mxu0 0
    %2565 = vmatprep.subr.bf16.mxu0 0
    %2566 = vmatpush1.bf16.msra.mxu0 0
    %2567 = vmatprep.subr.bf16.mxu0 0
    %2568 = vmatpush1.bf16.msra.mxu0 0
    %2569 = vmatprep.mubr.bf16.mxu0 0
    %2570 = vmatmul.mubr.bf16.gmra.mrb[0].mxu0 %v2535
    %v2571 = vpop.f32.mrb[0].mxu0
    %v2572 = vadd.f32 %v2289, %v2571
    %v2573 = vpop.f32.mrb[0].mxu0
    %v2574 = vpop.f32.mrb[0].mxu0
    %v2575 = vpop.f32.mrb[0].mxu0
    %2576 = vdwg.mxu0
    %v2577 = vadd.f32 %v2359, %v2430
    %v2578 = vadd.f32 %v2501, %v2572
    %v2579 = vadd.f32 %v2577, %v2578
    %v2580 = vld [vmem:[%s4 + $0x4] ss:$0 sm:$0xff]
    %v2581 = vadd.f32 %v2579, %v2580
    %v2582 = vlaneseq
    %v2583 = vand.u32 %v2582, 127
    %vm2584 = vcmp.lt.s32.totalorder %v2583, 2
    %v2585 = vsel %vm2584, %v2581, -1e+30
    %vm2586 = vcmask 1041408
    %v2587 = vsel %vm2586, %v2585, -inf
    %2588 = vmax.xlane.f32.xlu0 %v2587
    %v2589 = vpop.xlane.xlu0 %2588
    %v2590 = vsub.f32 %v2585, %v2589
    %v2591 = vmul.f32 %v2590, 1.442695
    %v2592 = vpow.pop %v2591
    %v2593 = vsel %vm2584, %v2592, 0.0
    %v2594 = vsel %vm2586, %v2593, 0.0
    %2595 = vadd.xlane.f32.xlu0 %v2594
    %v2596 = vpop.xlane.xlu0 %2595
    %v2597 = vlog2.pop %v2596
    %v2598 = vmul.f32 %v2597, 0.6931472
    %v2599 = vadd.f32 %v2589, %v2598
    %v2600 = vsub.f32 %v2585, %v2599
    %2601 = vst [vmem:[#allocation5] sm:$0x3] %v2600
    // Predicated region
    $region26: #{tpu_custom_call.1} parent=1 // pred_check
      _
    $region27: #{tpu_custom_call.1} parent=1 // pred_check_branch
      %2603 = sbr.rel (0) target = $region29
    $region28: #{tpu_custom_call.1} parent=1 // pred_region
      %s2605 = ssub.s32 32, 32
      %2606 = vsyncadd [#allocation4], %s2605
      %s2608 = sshll.u32 [#allocation5], 4
      %s2609 = int_to_ptr.vmem [resolvable:$true] %s2608
      %2611 = dma.vmem_to_hbm [thread:$0]  %s2609, 32, %s5, [#allocation4]
    $region29: #{tpu_custom_call.1} parent=1 // pred_fallthru
      _
    // Predicated region
    $region30: #{tpu_custom_call.1} parent=1 // pred_check
      _
    $region31: #{tpu_custom_call.1} parent=1 // pred_check_branch
      %2613 = sbr.rel (0) target = $region33
    $region32: #{tpu_custom_call.1} parent=1 // pred_region
      %2614 = dma.done [#allocation4], 32
    $region33: #{tpu_custom_call.1} parent=1 // pred_fallthru
      _
    %2615 = vsyncpa [#allocation3], 1
    %2616 = vsyncpa [#allocation4], 1

</llo_original>
